<compile_context>
chip_gen: v7x
topology: tpu7x:2x2x1
jax: 0.10.0
libtpu: 0.0.40
codegen_flags: <defaults>
</compile_context>

<pallas_src>
import functools
import math

import jax
import jax.numpy as jnp
from jax.experimental import pallas as pl
from jax.experimental.pallas import tpu as pltpu


def _round_up(x, m):
    return (x + m - 1) // m * m


def _encoder_layer_kernel(xq_ref, xkv_ref,
                          wq_ref, bq_ref, wkv_ref, bkv_ref,
                          wo_ref, bo_ref, g1_ref, beta1_ref,
                          w1_ref, b1_ref, w2_ref, b2_ref,
                          g2_ref, beta2_ref,
                          out_ref, *, n_head, d_kp, d_model, eps):
    f32, bf16 = jnp.float32, jnp.bfloat16

    xq = xq_ref[0]                       # (TQ, DP) f32 — query-row tile (kept f32 for residual/LN)
    xkv = xkv_ref[0]                     # (S,  DP) f32 — full sequence for K/V
    tq = xq.shape[0]
    s_len = xkv.shape[0]
    hp = n_head * d_kp                   # padded concat-of-heads width (multiple of 128)

    # ---- projections: Q for the row tile, fused K|V for the full sequence (bf16 MXU, f32 acc)
    # 1/sqrt(d_k) is folded into wq/bq by the wrapper.
    q = jnp.dot(xq.astype(bf16), wq_ref[...], preferred_element_type=f32) + bq_ref[...]      # (TQ, HP)
    kv = jnp.dot(xkv.astype(bf16), wkv_ref[...], preferred_element_type=f32) + bkv_ref[...]  # (S, 2*HP)

    # ---- head-batched attention (single batched contraction per matmul, no per-head loop) ---
    # Layout plumbing uses only 2-D transposes, tile-aligned major-dim reshapes and a
    # last-two-dims swap, all of which lower cleanly in Mosaic.
    qh = jnp.swapaxes(q.T.reshape(n_head, d_kp, tq), 1, 2).astype(bf16)    # (H, TQ, dk)
    kvT = kv.T                                                             # (2*HP, S)
    kt = kvT[:hp].reshape(n_head, d_kp, s_len).astype(bf16)                # (H, dk, S)
    vt = kvT[hp:].reshape(n_head, d_kp, s_len).astype(bf16)                # (H, dk, S)

    s = jnp.einsum("hqd,hdk->hqk", qh, kt, preferred_element_type=f32)     # (H, TQ, S)
    s = s - jnp.max(s, axis=-1, keepdims=True)
    p = jnp.exp(s)
    p = p * pl.reciprocal(jnp.sum(p, axis=-1, keepdims=True), approx=True)  # EUP, not VALU divide
    ctxT = jnp.einsum("hdk,hqk->hdq", vt, p.astype(bf16),
                      preferred_element_type=f32)                          # (H, dk, TQ)
    ctx = ctxT.reshape(hp, tq).T                                           # (TQ, HP)

    attn = jnp.dot(ctx.astype(bf16), wo_ref[...], preferred_element_type=f32) + bo_ref[...]

    # ---- residual + LayerNorm 1 (f32 statistics; padded tail lanes are exact zeros) ---------
    inv_d = 1.0 / d_model
    y = attn + xq
    mu = jnp.sum(y, axis=-1, keepdims=True) * inv_d
    var = jnp.sum(y * y, axis=-1, keepdims=True) * inv_d - mu * mu
    y = (y - mu) * jax.lax.rsqrt(var + eps) * g1_ref[...] + beta1_ref[...]

    # ---- position-wise FFN + residual + LayerNorm 2 ------------------------------------------
    h1 = jnp.dot(y.astype(bf16), w1_ref[...], preferred_element_type=f32) + b1_ref[...]
    h1 = jnp.maximum(h1, 0.0)
    f = jnp.dot(h1.astype(bf16), w2_ref[...], preferred_element_type=f32) + b2_ref[...]

    z = f + y
    mu2 = jnp.sum(z, axis=-1, keepdims=True) * inv_d
    var2 = jnp.sum(z * z, axis=-1, keepdims=True) * inv_d - mu2 * mu2
    z = (z - mu2) * jax.lax.rsqrt(var2 + eps) * g2_ref[...] + beta2_ref[...]

    out_ref[0] = z.astype(out_ref.dtype)


def pack_encoder_params(p, d_model, d_hidden, n_head, mxu_dtype=jnp.bfloat16):
    """Pad to lane-friendly widths, fuse K|V, fold 1/sqrt(d_k) into Wq, cast MXU weights."""
    assert d_model % n_head == 0
    d_k = d_model // n_head
    g = 128 // math.gcd(n_head, 128)       # smallest per-head pad so n_head*d_kp % 128 == 0
    d_kp = _round_up(d_k, g)
    dp = _round_up(d_model, 128)           # padded d_model ("plain" layout: x, residual, LN, FFN)
    hp = n_head * d_kp                     # padded concat-of-heads width
    dhp = _round_up(d_hidden, 128)         # padded FFN hidden width
    scale = 1.0 / math.sqrt(d_k)

    def head_pad_cols(w):                  # (R, d_model) -> (R, hp): pad each head's d_k -> d_kp
        r = w.shape[0]
        w = w.reshape(r, n_head, d_k)
        return jnp.pad(w, ((0, 0), (0, 0), (0, d_kp - d_k))).reshape(r, hp)

    def head_pad_rows(w):                  # (d_model, C) -> (hp, C)
        c = w.shape[1]
        w = w.reshape(n_head, d_k, c)
        return jnp.pad(w, ((0, 0), (0, d_kp - d_k), (0, 0))).reshape(hp, c)

    def pad2(w, rows, cols):
        return jnp.pad(w, ((0, rows - w.shape[0]), (0, cols - w.shape[1])))

    wq = pad2(head_pad_cols(p["wq"] * scale), dp, hp)   # scale folded into Wq/bq
    bq = head_pad_cols(p["bq"] * scale)
    wk = pad2(head_pad_cols(p["wk"]), dp, hp)
    bk = head_pad_cols(p["bk"])
    wv = pad2(head_pad_cols(p["wv"]), dp, hp)
    bv = head_pad_cols(p["bv"])
    wkv = jnp.concatenate([wk, wv], axis=1)             # (dp, 2*hp) fused K|V weight
    bkv = jnp.concatenate([bk, bv], axis=1)             # (1, 2*hp)

    wo = pad2(head_pad_rows(p["wo"]), hp, dp)
    bo = pad2(p["bo"], 1, dp)
    w1 = pad2(p["w1"], dp, dhp)
    b1 = pad2(p["b1"], 1, dhp)
    w2 = pad2(p["w2"], dhp, dp)
    b2 = pad2(p["b2"], 1, dp)

    packed = {
        "wq": wq.astype(mxu_dtype), "bq": bq,
        "wkv": wkv.astype(mxu_dtype), "bkv": bkv,
        "wo": wo.astype(mxu_dtype), "bo": bo,
        "g1": pad2(p["g1"], 1, dp), "beta1": pad2(p["beta1"], 1, dp),
        "w1": w1.astype(mxu_dtype), "b1": b1,
        "w2": w2.astype(mxu_dtype), "b2": b2,
        "g2": pad2(p["g2"], 1, dp), "beta2": pad2(p["beta2"], 1, dp),
    }
    meta = {"dp": dp, "hp": hp, "dhp": dhp, "d_kp": d_kp,
            "n_head": n_head, "d_model": d_model, "d_hidden": d_hidden}
    return packed, meta


def encoder_layer_pallas(x, packed, meta, *, eps=1e-5, block_q=128):
    b, s, d = x.shape
    dp, hp, dhp = meta["dp"], meta["hp"], meta["dhp"]
    n_head, d_kp = meta["n_head"], meta["d_kp"]

    x_p = jnp.pad(x.astype(jnp.float32), ((0, 0), (0, 0), (0, dp - d)))

    tq = s if s <= block_q else block_q          # q-row tile (full dim or multiple of 8)
    nqb = pl.cdiv(s, tq)

    kernel = functools.partial(_encoder_layer_kernel,
                               n_head=n_head, d_kp=d_kp, d_model=d, eps=eps)

    def wspec(shape):
        # grid-resident weight/bias tiles: constant block index -> fetched once, no re-DMA
        # TODO(synk): on v7x consider pipeline_mode=pl.Buffered(1) to avoid the duplicate buffer.
        return pl.BlockSpec(shape, lambda bi, qi: (0, 0))

    in_specs = [
        pl.BlockSpec((1, tq, dp), lambda bi, qi: (bi, qi, 0)),   # x: query-row tile
        pl.BlockSpec((1, s, dp), lambda bi, qi: (bi, 0, 0)),     # x: full sequence for K/V
        wspec((dp, hp)), wspec((1, hp)),          # wq, bq   (scale folded in)
        wspec((dp, 2 * hp)), wspec((1, 2 * hp)),  # wkv, bkv (fused K|V)
        wspec((hp, dp)), wspec((1, dp)),          # wo, bo
        wspec((1, dp)), wspec((1, dp)),           # ln1 gamma, beta
        wspec((dp, dhp)), wspec((1, dhp)),        # w1, b1
        wspec((dhp, dp)), wspec((1, dp)),         # w2, b2
        wspec((1, dp)), wspec((1, dp)),           # ln2 gamma, beta
    ]

    weight_bytes = sum(int(v.size) * v.dtype.itemsize for v in packed.values())
    flops = int(2 * b * s * dp * hp                  # Q projection
                + 2 * b * s * dp * 2 * hp * nqb      # fused K/V projection (per q tile)
                + 4 * b * n_head * s * s * d_kp      # scores + context
                + 2 * b * s * hp * dp                # output projection
                + 4 * b * s * dp * dhp)              # FFN
    transcendentals = int(b * n_head * s * s + 4 * b * s)
    bytes_accessed = int(2 * x_p.size * 4 + b * s * dp * 4 + weight_bytes)

    act_bytes = 4 * (tq * dp + s * dp + tq * dp)
    tmp_bytes = 4 * (2 * s * hp + 2 * n_head * tq * s + 2 * tq * max(dp, dhp) + 2 * tq * hp)
    vmem_est = 2 * weight_bytes + 2 * act_bytes + tmp_bytes
    vmem_limit = int(min(56 * 1024 * 1024, max(32 * 1024 * 1024, 2 * vmem_est)))

    out_p = pl.pallas_call(
        kernel,
        out_shape=jax.ShapeDtypeStruct((b, s, dp), jnp.float32),
        grid=(b, nqb),
        in_specs=in_specs,
        out_specs=pl.BlockSpec((1, tq, dp), lambda bi, qi: (bi, qi, 0)),
        compiler_params=pltpu.CompilerParams(
            dimension_semantics=("parallel", "parallel"),
            vmem_limit_bytes=vmem_limit),
        cost_estimate=pl.CostEstimate(flops=flops,
                                      transcendentals=transcendentals,
                                      bytes_accessed=bytes_accessed),
    )(x_p, x_p,
      packed["wq"], packed["bq"], packed["wkv"], packed["bkv"],
      packed["wo"], packed["bo"], packed["g1"], packed["beta1"],
      packed["w1"], packed["b1"], packed["w2"], packed["b2"],
      packed["g2"], packed["beta2"])

    return out_p[..., :d]


def encoder_layer_ref(x, p, n_head, eps=1e-5):
    """Pure-JAX f32 reference for correctness checking."""
    B, S, D = x.shape
    d_k = D // n_head

    def ln(y, g, b):
        mu = jnp.mean(y, axis=-1, keepdims=True)
        var = jnp.mean((y - mu) ** 2, axis=-1, keepdims=True)
        return (y - mu) * jax.lax.rsqrt(var + eps) * g + b

    q = (x @ p["wq"] + p["bq"]).reshape(B, S, n_head, d_k).transpose(0, 2, 1, 3)
    k = (x @ p["wk"] + p["bk"]).reshape(B, S, n_head, d_k).transpose(0, 2, 1, 3)
    v = (x @ p["wv"] + p["bv"]).reshape(B, S, n_head, d_k).transpose(0, 2, 1, 3)
    s = jnp.einsum("bhqd,bhkd->bhqk", q, k) / (d_k ** 0.5)
    a = jax.nn.softmax(s, axis=-1)
    ctx = jnp.einsum("bhqk,bhkd->bhqd", a, v).transpose(0, 2, 1, 3).reshape(B, S, D)
    y = ln(ctx @ p["wo"] + p["bo"] + x, p["g1"], p["beta1"])
    f = jnp.maximum(y @ p["w1"] + p["b1"], 0.0) @ p["w2"] + p["b2"]
    return ln(f + y, p["g2"], p["beta2"])


def make_params(key, d_model, d_hidden):
    ks = jax.random.split(key, 8)
    sc = 0.05
    return {
        "wq": sc * jax.random.normal(ks[0], (d_model, d_model), jnp.float32),
        "bq": jnp.zeros((1, d_model), jnp.float32),
        "wk": sc * jax.random.normal(ks[1], (d_model, d_model), jnp.float32),
        "bk": jnp.zeros((1, d_model), jnp.float32),
        "wv": sc * jax.random.normal(ks[2], (d_model, d_model), jnp.float32),
        "bv": jnp.zeros((1, d_model), jnp.float32),
        "wo": sc * jax.random.normal(ks[3], (d_model, d_model), jnp.float32),
        "bo": 0.01 * jax.random.normal(ks[4], (1, d_model), jnp.float32),
        "g1": jnp.ones((1, d_model), jnp.float32),
        "beta1": jnp.zeros((1, d_model), jnp.float32),
        "w1": sc * jax.random.normal(ks[5], (d_model, d_hidden), jnp.float32),
        "b1": 0.01 * jax.random.normal(ks[6], (1, d_hidden), jnp.float32),
        "w2": sc * jax.random.normal(ks[7], (d_hidden, d_model), jnp.float32),
        "b2": jnp.zeros((1, d_model), jnp.float32),
        "g2": jnp.ones((1, d_model), jnp.float32),
        "beta2": jnp.zeros((1, d_model), jnp.float32),
    }


if __name__ == "__main__":
    B, S, D, H, Dh = 2, 8, 32, 4, 64   # batch, seq, d_model, n_head, d_hidden

    key = jax.random.PRNGKey(0)
    k_x, k_p = jax.random.split(key)
    x = jax.random.normal(k_x, (B, S, D), jnp.float32)
    params = make_params(k_p, D, Dh)

    packed, meta = pack_encoder_params(params, D, Dh, H)
    out = encoder_layer_pallas(x, packed, meta)
    out = jax.block_until_ready(out)

    ref = encoder_layer_ref(x, params, n_head=H)
    assert out.shape == (B, S, D)
    max_err = float(jnp.max(jnp.abs(out - ref)))
    # bf16 MXU inputs + approx reciprocal -> relaxed tolerance vs the f32 reference
    assert jnp.allclose(out, ref, atol=2e-2, rtol=2e-2), f"mismatch vs reference (max |err|={max_err})"

    print("KERNEL_OK")
</pallas_src>

<mosaic_0001>
module attributes {stable_mosaic.version = 11 : i64} {
  func.func @_encoder_layer_kernel(%arg0: i32, %arg1: i32, %arg2: memref<1x8x128xf32, #tpu.memory_space<vmem>>, %arg3: memref<1x8x128xf32, #tpu.memory_space<vmem>>, %arg4: memref<128x128xbf16, #tpu.memory_space<vmem>>, %arg5: memref<1x128xf32, #tpu.memory_space<vmem>>, %arg6: memref<128x256xbf16, #tpu.memory_space<vmem>>, %arg7: memref<1x256xf32, #tpu.memory_space<vmem>>, %arg8: memref<128x128xbf16, #tpu.memory_space<vmem>>, %arg9: memref<1x128xf32, #tpu.memory_space<vmem>>, %arg10: memref<1x128xf32, #tpu.memory_space<vmem>>, %arg11: memref<1x128xf32, #tpu.memory_space<vmem>>, %arg12: memref<128x128xbf16, #tpu.memory_space<vmem>>, %arg13: memref<1x128xf32, #tpu.memory_space<vmem>>, %arg14: memref<128x128xbf16, #tpu.memory_space<vmem>>, %arg15: memref<1x128xf32, #tpu.memory_space<vmem>>, %arg16: memref<1x128xf32, #tpu.memory_space<vmem>>, %arg17: memref<1x128xf32, #tpu.memory_space<vmem>>, %arg18: memref<1x8x128xf32, #tpu.memory_space<vmem>>) attributes {dimension_semantics = [#tpu.dimension_semantics<parallel>, #tpu.dimension_semantics<parallel>], iteration_bounds = array<i64: 2, 1>, scalar_prefetch = 0 : i64, scratch_operands = 0 : i64, tpu.core_type = #tpu.core_type<tc>, window_params = [{transform_indices = @transform_0, window_bounds = array<i64: 1, 8, 128>}, {transform_indices = @transform_1, window_bounds = array<i64: 1, 8, 128>}, {pipeline_mode = #tpu.pipeline_mode<synchronous>, transform_indices = @transform_2, window_bounds = array<i64: 128, 128>}, {pipeline_mode = #tpu.pipeline_mode<synchronous>, transform_indices = @transform_3, window_bounds = array<i64: 1, 128>}, {pipeline_mode = #tpu.pipeline_mode<synchronous>, transform_indices = @transform_4, window_bounds = array<i64: 128, 256>}, {pipeline_mode = #tpu.pipeline_mode<synchronous>, transform_indices = @transform_5, window_bounds = array<i64: 1, 256>}, {pipeline_mode = #tpu.pipeline_mode<synchronous>, transform_indices = @transform_6, window_bounds = array<i64: 128, 128>}, {pipeline_mode = #tpu.pipeline_mode<synchronous>, transform_indices = @transform_7, window_bounds = array<i64: 1, 128>}, {pipeline_mode = #tpu.pipeline_mode<synchronous>, transform_indices = @transform_8, window_bounds = array<i64: 1, 128>}, {pipeline_mode = #tpu.pipeline_mode<synchronous>, transform_indices = @transform_9, window_bounds = array<i64: 1, 128>}, {pipeline_mode = #tpu.pipeline_mode<synchronous>, transform_indices = @transform_10, window_bounds = array<i64: 128, 128>}, {pipeline_mode = #tpu.pipeline_mode<synchronous>, transform_indices = @transform_11, window_bounds = array<i64: 1, 128>}, {pipeline_mode = #tpu.pipeline_mode<synchronous>, transform_indices = @transform_12, window_bounds = array<i64: 128, 128>}, {pipeline_mode = #tpu.pipeline_mode<synchronous>, transform_indices = @transform_13, window_bounds = array<i64: 1, 128>}, {pipeline_mode = #tpu.pipeline_mode<synchronous>, transform_indices = @transform_14, window_bounds = array<i64: 1, 128>}, {pipeline_mode = #tpu.pipeline_mode<synchronous>, transform_indices = @transform_15, window_bounds = array<i64: 1, 128>}, {transform_indices = @transform_16, window_bounds = array<i64: 1, 8, 128>}]} {
    %c0 = arith.constant 0 : index
    %c0_0 = arith.constant 0 : index
    %c0_1 = arith.constant 0 : index
    %0 = vector.load %arg2[%c0, %c0_0, %c0_1] : memref<1x8x128xf32, #tpu.memory_space<vmem>>, vector<1x8x128xf32>
    %1 = vector.shape_cast %0 : vector<1x8x128xf32> to vector<8x128xf32>
    %c0_2 = arith.constant 0 : index
    %c0_3 = arith.constant 0 : index
    %c0_4 = arith.constant 0 : index
    %2 = vector.load %arg3[%c0_2, %c0_3, %c0_4] : memref<1x8x128xf32, #tpu.memory_space<vmem>>, vector<1x8x128xf32>
    %3 = vector.shape_cast %2 : vector<1x8x128xf32> to vector<8x128xf32>
    %4 = arith.truncf %1 : vector<8x128xf32> to vector<8x128xbf16>
    %c0_5 = arith.constant 0 : index
    %c0_6 = arith.constant 0 : index
    %5 = vector.load %arg4[%c0_5, %c0_6] : memref<128x128xbf16, #tpu.memory_space<vmem>>, vector<128x128xbf16>
    %cst = arith.constant dense<0.000000e+00> : vector<8x128xf32>
    %6 = tpu.matmul %4, %5, %cst {dimension_numbers = #tpu.dot_dimension_numbers<[1], [0], [0], [1], [0, 0, 1, 1], [], []>} : vector<8x128xbf16>, vector<128x128xbf16>, vector<8x128xf32> -> vector<8x128xf32>
    %c0_7 = arith.constant 0 : index
    %c0_8 = arith.constant 0 : index
    %7 = vector.load %arg5[%c0_7, %c0_8] : memref<1x128xf32, #tpu.memory_space<vmem>>, vector<1x128xf32>
    %8 = vector.broadcast %7 : vector<1x128xf32> to vector<8x128xf32>
    %9 = arith.addf %6, %8 : vector<8x128xf32>
    %10 = arith.truncf %3 : vector<8x128xf32> to vector<8x128xbf16>
    %c0_9 = arith.constant 0 : index
    %c0_10 = arith.constant 0 : index
    %11 = vector.load %arg6[%c0_9, %c0_10] : memref<128x256xbf16, #tpu.memory_space<vmem>>, vector<128x256xbf16>
    %cst_11 = arith.constant dense<0.000000e+00> : vector<8x256xf32>
    %12 = tpu.matmul %10, %11, %cst_11 {dimension_numbers = #tpu.dot_dimension_numbers<[1], [0], [0], [1], [0, 0, 1, 1], [], []>} : vector<8x128xbf16>, vector<128x256xbf16>, vector<8x256xf32> -> vector<8x256xf32>
    %c0_12 = arith.constant 0 : index
    %c0_13 = arith.constant 0 : index
    %13 = vector.load %arg7[%c0_12, %c0_13] : memref<1x256xf32, #tpu.memory_space<vmem>>, vector<1x256xf32>
    %14 = vector.broadcast %13 : vector<1x256xf32> to vector<8x256xf32>
    %15 = arith.addf %12, %14 : vector<8x256xf32>
    %16 = tpu.transpose %9, [1, 0] : vector<8x128xf32> -> vector<128x8xf32>
    %17 = vector.shape_cast %16 : vector<128x8xf32> to vector<4x32x8xf32>
    %18 = tpu.transpose %17, [0, 2, 1] : vector<4x32x8xf32> -> vector<4x8x32xf32>
    %19 = arith.truncf %18 : vector<4x8x32xf32> to vector<4x8x32xbf16>
    %20 = tpu.transpose %15, [1, 0] : vector<8x256xf32> -> vector<256x8xf32>
    %21 = vector.extract_strided_slice %20 {offsets = [0, 0], sizes = [128, 8], strides = [1, 1]} : vector<256x8xf32> to vector<128x8xf32>
    %22 = vector.shape_cast %21 : vector<128x8xf32> to vector<4x32x8xf32>
    %23 = arith.truncf %22 : vector<4x32x8xf32> to vector<4x32x8xbf16>
    %24 = vector.extract_strided_slice %20 {offsets = [128, 0], sizes = [128, 8], strides = [1, 1]} : vector<256x8xf32> to vector<128x8xf32>
    %25 = vector.shape_cast %24 : vector<128x8xf32> to vector<4x32x8xf32>
    %26 = arith.truncf %25 : vector<4x32x8xf32> to vector<4x32x8xbf16>
    "tpu.trace_start"() <{level = 10 : i32, message = "hqd,hdk->hqk"}> : () -> ()
    %cst_14 = arith.constant dense<0.000000e+00> : vector<4x8x8xf32>
    %27 = tpu.matmul %19, %23, %cst_14 {dimension_numbers = #tpu.dot_dimension_numbers<[2], [1], [1], [2], [0, 0, 0, 1, 1, 2], [0], [0]>} : vector<4x8x32xbf16>, vector<4x32x8xbf16>, vector<4x8x8xf32> -> vector<4x8x8xf32>
    "tpu.trace_stop"() : () -> ()
    %cst_15 = arith.constant dense<0xFF800000> : vector<4x8xf32>
    %28 = vector.multi_reduction <maximumf>, %27, %cst_15 [2] : vector<4x8x8xf32> to vector<4x8xf32>
    %29 = vector.shape_cast %28 : vector<4x8xf32> to vector<4x8x1xf32>
    %30 = vector.broadcast %29 : vector<4x8x1xf32> to vector<4x8x8xf32>
    %31 = arith.subf %27, %30 : vector<4x8x8xf32>
    %32 = math.exp %31 : vector<4x8x8xf32>
    %cst_16 = arith.constant dense<0.000000e+00> : vector<4x8xf32>
    %33 = vector.multi_reduction <add>, %32, %cst_16 [2] : vector<4x8x8xf32> to vector<4x8xf32>
    %34 = vector.shape_cast %33 : vector<4x8xf32> to vector<4x8x1xf32>
    %35 = tpu.reciprocal %34 {approx = true} : vector<4x8x1xf32> -> vector<4x8x1xf32>
    %36 = vector.broadcast %35 : vector<4x8x1xf32> to vector<4x8x8xf32>
    %37 = arith.mulf %32, %36 : vector<4x8x8xf32>
    %38 = arith.truncf %37 : vector<4x8x8xf32> to vector<4x8x8xbf16>
    "tpu.trace_start"() <{level = 10 : i32, message = "hdk,hqk->hdq"}> : () -> ()
    %cst_17 = arith.constant dense<0.000000e+00> : vector<4x32x8xf32>
    %39 = tpu.matmul %26, %38, %cst_17 {dimension_numbers = #tpu.dot_dimension_numbers<[2], [2], [1], [1], [0, 0, 0, 1, 1, 1], [0], [0]>} : vector<4x32x8xbf16>, vector<4x8x8xbf16>, vector<4x32x8xf32> -> vector<4x32x8xf32>
    "tpu.trace_stop"() : () -> ()
    %40 = vector.shape_cast %39 : vector<4x32x8xf32> to vector<128x8xf32>
    %41 = tpu.transpose %40, [1, 0] : vector<128x8xf32> -> vector<8x128xf32>
    %42 = arith.truncf %41 : vector<8x128xf32> to vector<8x128xbf16>
    %c0_18 = arith.constant 0 : index
    %c0_19 = arith.constant 0 : index
    %43 = vector.load %arg8[%c0_18, %c0_19] : memref<128x128xbf16, #tpu.memory_space<vmem>>, vector<128x128xbf16>
    %cst_20 = arith.constant dense<0.000000e+00> : vector<8x128xf32>
    %44 = tpu.matmul %42, %43, %cst_20 {dimension_numbers = #tpu.dot_dimension_numbers<[1], [0], [0], [1], [0, 0, 1, 1], [], []>} : vector<8x128xbf16>, vector<128x128xbf16>, vector<8x128xf32> -> vector<8x128xf32>
    %c0_21 = arith.constant 0 : index
    %c0_22 = arith.constant 0 : index
    %45 = vector.load %arg9[%c0_21, %c0_22] : memref<1x128xf32, #tpu.memory_space<vmem>>, vector<1x128xf32>
    %46 = vector.broadcast %45 : vector<1x128xf32> to vector<8x128xf32>
    %47 = arith.addf %44, %46 : vector<8x128xf32>
    %48 = arith.addf %47, %1 : vector<8x128xf32>
    %cst_23 = arith.constant dense<0.000000e+00> : vector<8xf32>
    %49 = vector.multi_reduction <add>, %48, %cst_23 [1] : vector<8x128xf32> to vector<8xf32>
    %50 = vector.shape_cast %49 : vector<8xf32> to vector<8x1xf32>
    %cst_24 = arith.constant 3.125000e-02 : f32
    %51 = vector.broadcast %cst_24 : f32 to vector<8x1xf32>
    %52 = arith.mulf %50, %51 : vector<8x1xf32>
    %53 = arith.mulf %48, %48 : vector<8x128xf32>
    %cst_25 = arith.constant dense<0.000000e+00> : vector<8xf32>
    %54 = vector.multi_reduction <add>, %53, %cst_25 [1] : vector<8x128xf32> to vector<8xf32>
    %55 = vector.shape_cast %54 : vector<8xf32> to vector<8x1xf32>
    %cst_26 = arith.constant 3.125000e-02 : f32
    %56 = vector.broadcast %cst_26 : f32 to vector<8x1xf32>
    %57 = arith.mulf %55, %56 : vector<8x1xf32>
    %58 = arith.mulf %52, %52 : vector<8x1xf32>
    %59 = arith.subf %57, %58 : vector<8x1xf32>
    %60 = vector.broadcast %52 : vector<8x1xf32> to vector<8x128xf32>
    %61 = arith.subf %48, %60 : vector<8x128xf32>
    %cst_27 = arith.constant 9.99999974E-6 : f32
    %62 = vector.broadcast %cst_27 : f32 to vector<8x1xf32>
    %63 = arith.addf %59, %62 : vector<8x1xf32>
    %64 = math.rsqrt %63 : vector<8x1xf32>
    %65 = vector.broadcast %64 : vector<8x1xf32> to vector<8x128xf32>
    %66 = arith.mulf %61, %65 : vector<8x128xf32>
    %c0_28 = arith.constant 0 : index
    %c0_29 = arith.constant 0 : index
    %67 = vector.load %arg10[%c0_28, %c0_29] : memref<1x128xf32, #tpu.memory_space<vmem>>, vector<1x128xf32>
    %68 = vector.broadcast %67 : vector<1x128xf32> to vector<8x128xf32>
    %69 = arith.mulf %66, %68 : vector<8x128xf32>
    %c0_30 = arith.constant 0 : index
    %c0_31 = arith.constant 0 : index
    %70 = vector.load %arg11[%c0_30, %c0_31] : memref<1x128xf32, #tpu.memory_space<vmem>>, vector<1x128xf32>
    %71 = vector.broadcast %70 : vector<1x128xf32> to vector<8x128xf32>
    %72 = arith.addf %69, %71 : vector<8x128xf32>
    %73 = arith.truncf %72 : vector<8x128xf32> to vector<8x128xbf16>
    %c0_32 = arith.constant 0 : index
    %c0_33 = arith.constant 0 : index
    %74 = vector.load %arg12[%c0_32, %c0_33] : memref<128x128xbf16, #tpu.memory_space<vmem>>, vector<128x128xbf16>
    %cst_34 = arith.constant dense<0.000000e+00> : vector<8x128xf32>
    %75 = tpu.matmul %73, %74, %cst_34 {dimension_numbers = #tpu.dot_dimension_numbers<[1], [0], [0], [1], [0, 0, 1, 1], [], []>} : vector<8x128xbf16>, vector<128x128xbf16>, vector<8x128xf32> -> vector<8x128xf32>
    %c0_35 = arith.constant 0 : index
    %c0_36 = arith.constant 0 : index
    %76 = vector.load %arg13[%c0_35, %c0_36] : memref<1x128xf32, #tpu.memory_space<vmem>>, vector<1x128xf32>
    %77 = vector.broadcast %76 : vector<1x128xf32> to vector<8x128xf32>
    %78 = arith.addf %75, %77 : vector<8x128xf32>
    %cst_37 = arith.constant 0.000000e+00 : f32
    %79 = vector.broadcast %cst_37 : f32 to vector<8x128xf32>
    %80 = arith.maximumf %78, %79 : vector<8x128xf32>
    %81 = arith.truncf %80 : vector<8x128xf32> to vector<8x128xbf16>
    %c0_38 = arith.constant 0 : index
    %c0_39 = arith.constant 0 : index
    %82 = vector.load %arg14[%c0_38, %c0_39] : memref<128x128xbf16, #tpu.memory_space<vmem>>, vector<128x128xbf16>
    %cst_40 = arith.constant dense<0.000000e+00> : vector<8x128xf32>
    %83 = tpu.matmul %81, %82, %cst_40 {dimension_numbers = #tpu.dot_dimension_numbers<[1], [0], [0], [1], [0, 0, 1, 1], [], []>} : vector<8x128xbf16>, vector<128x128xbf16>, vector<8x128xf32> -> vector<8x128xf32>
    %c0_41 = arith.constant 0 : index
    %c0_42 = arith.constant 0 : index
    %84 = vector.load %arg15[%c0_41, %c0_42] : memref<1x128xf32, #tpu.memory_space<vmem>>, vector<1x128xf32>
    %85 = vector.broadcast %84 : vector<1x128xf32> to vector<8x128xf32>
    %86 = arith.addf %83, %85 : vector<8x128xf32>
    %87 = arith.addf %86, %72 : vector<8x128xf32>
    %cst_43 = arith.constant dense<0.000000e+00> : vector<8xf32>
    %88 = vector.multi_reduction <add>, %87, %cst_43 [1] : vector<8x128xf32> to vector<8xf32>
    %89 = vector.shape_cast %88 : vector<8xf32> to vector<8x1xf32>
    %cst_44 = arith.constant 3.125000e-02 : f32
    %90 = vector.broadcast %cst_44 : f32 to vector<8x1xf32>
    %91 = arith.mulf %89, %90 : vector<8x1xf32>
    %92 = arith.mulf %87, %87 : vector<8x128xf32>
    %cst_45 = arith.constant dense<0.000000e+00> : vector<8xf32>
    %93 = vector.multi_reduction <add>, %92, %cst_45 [1] : vector<8x128xf32> to vector<8xf32>
    %94 = vector.shape_cast %93 : vector<8xf32> to vector<8x1xf32>
    %cst_46 = arith.constant 3.125000e-02 : f32
    %95 = vector.broadcast %cst_46 : f32 to vector<8x1xf32>
    %96 = arith.mulf %94, %95 : vector<8x1xf32>
    %97 = arith.mulf %91, %91 : vector<8x1xf32>
    %98 = arith.subf %96, %97 : vector<8x1xf32>
    %99 = vector.broadcast %91 : vector<8x1xf32> to vector<8x128xf32>
    %100 = arith.subf %87, %99 : vector<8x128xf32>
    %cst_47 = arith.constant 9.99999974E-6 : f32
    %101 = vector.broadcast %cst_47 : f32 to vector<8x1xf32>
    %102 = arith.addf %98, %101 : vector<8x1xf32>
    %103 = math.rsqrt %102 : vector<8x1xf32>
    %104 = vector.broadcast %103 : vector<8x1xf32> to vector<8x128xf32>
    %105 = arith.mulf %100, %104 : vector<8x128xf32>
    %c0_48 = arith.constant 0 : index
    %c0_49 = arith.constant 0 : index
    %106 = vector.load %arg16[%c0_48, %c0_49] : memref<1x128xf32, #tpu.memory_space<vmem>>, vector<1x128xf32>
    %107 = vector.broadcast %106 : vector<1x128xf32> to vector<8x128xf32>
    %108 = arith.mulf %105, %107 : vector<8x128xf32>
    %c0_50 = arith.constant 0 : index
    %c0_51 = arith.constant 0 : index
    %109 = vector.load %arg17[%c0_50, %c0_51] : memref<1x128xf32, #tpu.memory_space<vmem>>, vector<1x128xf32>
    %110 = vector.broadcast %109 : vector<1x128xf32> to vector<8x128xf32>
    %111 = arith.addf %108, %110 : vector<8x128xf32>
    %c0_52 = arith.constant 0 : index
    %c0_53 = arith.constant 0 : index
    %c0_54 = arith.constant 0 : index
    %112 = vector.load %arg18[%c0_52, %c0_53, %c0_54] : memref<1x8x128xf32, #tpu.memory_space<vmem>>, vector<1x8x128xf32>
    %113 = vector.shape_cast %112 : vector<1x8x128xf32> to vector<8x128xf32>
    %114 = vector.shape_cast %111 : vector<8x128xf32> to vector<1x8x128xf32>
    tpu.vector_store %arg18[%c0_52, %c0_53, %c0_54], %114 {strides = array<i32>} : memref<1x8x128xf32, #tpu.memory_space<vmem>>, vector<1x8x128xf32>,
    return
  }
  func.func @transform_0(%arg0: i32, %arg1: i32) -> (i32, i32, i32) {
    %c0_i32 = arith.constant 0 : i32
    %c0_i32_0 = arith.constant 0 : i32
    return %arg0, %arg1, %c0_i32 : i32, i32, i32
  }
  func.func @transform_1(%arg0: i32, %arg1: i32) -> (i32, i32, i32) {
    %c0_i32 = arith.constant 0 : i32
    %c0_i32_0 = arith.constant 0 : i32
    %c0_i32_1 = arith.constant 0 : i32
    return %arg0, %c0_i32, %c0_i32_0 : i32, i32, i32
  }
  func.func @transform_2(%arg0: i32, %arg1: i32) -> (i32, i32) {
    %c0_i32 = arith.constant 0 : i32
    %c0_i32_0 = arith.constant 0 : i32
    %c0_i32_1 = arith.constant 0 : i32
    return %c0_i32, %c0_i32_0 : i32, i32
  }
  func.func @transform_3(%arg0: i32, %arg1: i32) -> (i32, i32) {
    %c0_i32 = arith.constant 0 : i32
    %c0_i32_0 = arith.constant 0 : i32
    %c0_i32_1 = arith.constant 0 : i32
    return %c0_i32, %c0_i32_0 : i32, i32
  }
  func.func @transform_4(%arg0: i32, %arg1: i32) -> (i32, i32) {
    %c0_i32 = arith.constant 0 : i32
    %c0_i32_0 = arith.constant 0 : i32
    %c0_i32_1 = arith.constant 0 : i32
    return %c0_i32, %c0_i32_0 : i32, i32
  }
  func.func @transform_5(%arg0: i32, %arg1: i32) -> (i32, i32) {
    %c0_i32 = arith.constant 0 : i32
    %c0_i32_0 = arith.constant 0 : i32
    %c0_i32_1 = arith.constant 0 : i32
    return %c0_i32, %c0_i32_0 : i32, i32
  }
  func.func @transform_6(%arg0: i32, %arg1: i32) -> (i32, i32) {
    %c0_i32 = arith.constant 0 : i32
    %c0_i32_0 = arith.constant 0 : i32
    %c0_i32_1 = arith.constant 0 : i32
    return %c0_i32, %c0_i32_0 : i32, i32
  }
  func.func @transform_7(%arg0: i32, %arg1: i32) -> (i32, i32) {
    %c0_i32 = arith.constant 0 : i32
    %c0_i32_0 = arith.constant 0 : i32
    %c0_i32_1 = arith.constant 0 : i32
    return %c0_i32, %c0_i32_0 : i32, i32
  }
  func.func @transform_8(%arg0: i32, %arg1: i32) -> (i32, i32) {
    %c0_i32 = arith.constant 0 : i32
    %c0_i32_0 = arith.constant 0 : i32
    %c0_i32_1 = arith.constant 0 : i32
    return %c0_i32, %c0_i32_0 : i32, i32
  }
  func.func @transform_9(%arg0: i32, %arg1: i32) -> (i32, i32) {
    %c0_i32 = arith.constant 0 : i32
    %c0_i32_0 = arith.constant 0 : i32
    %c0_i32_1 = arith.constant 0 : i32
    return %c0_i32, %c0_i32_0 : i32, i32
  }
  func.func @transform_10(%arg0: i32, %arg1: i32) -> (i32, i32) {
    %c0_i32 = arith.constant 0 : i32
    %c0_i32_0 = arith.constant 0 : i32
    %c0_i32_1 = arith.constant 0 : i32
    return %c0_i32, %c0_i32_0 : i32, i32
  }
  func.func @transform_11(%arg0: i32, %arg1: i32) -> (i32, i32) {
    %c0_i32 = arith.constant 0 : i32
    %c0_i32_0 = arith.constant 0 : i32
    %c0_i32_1 = arith.constant 0 : i32
    return %c0_i32, %c0_i32_0 : i32, i32
  }
  func.func @transform_12(%arg0: i32, %arg1: i32) -> (i32, i32) {
    %c0_i32 = arith.constant 0 : i32
    %c0_i32_0 = arith.constant 0 : i32
    %c0_i32_1 = arith.constant 0 : i32
    return %c0_i32, %c0_i32_0 : i32, i32
  }
  func.func @transform_13(%arg0: i32, %arg1: i32) -> (i32, i32) {
    %c0_i32 = arith.constant 0 : i32
    %c0_i32_0 = arith.constant 0 : i32
    %c0_i32_1 = arith.constant 0 : i32
    return %c0_i32, %c0_i32_0 : i32, i32
  }
  func.func @transform_14(%arg0: i32, %arg1: i32) -> (i32, i32) {
    %c0_i32 = arith.constant 0 : i32
    %c0_i32_0 = arith.constant 0 : i32
    %c0_i32_1 = arith.constant 0 : i32
    return %c0_i32, %c0_i32_0 : i32, i32
  }
  func.func @transform_15(%arg0: i32, %arg1: i32) -> (i32, i32) {
    %c0_i32 = arith.constant 0 : i32
    %c0_i32_0 = arith.constant 0 : i32
    %c0_i32_1 = arith.constant 0 : i32
    return %c0_i32, %c0_i32_0 : i32, i32
  }
  func.func @transform_16(%arg0: i32, %arg1: i32) -> (i32, i32, i32) {
    %c0_i32 = arith.constant 0 : i32
    %c0_i32_0 = arith.constant 0 : i32
    return %arg0, %arg1, %c0_i32 : i32, i32, i32
  }
}

</mosaic_0001>

<llo_original>
// kernel: tpu_custom_call.1
$region0: #{tpu_custom_call.1}
  #allocation0 [shape = 'u32[]', space=smem, size = 0x4, offset = 0x4, fixed_abs, tag = 'smem constant byte address 0x4 - core index']
  #allocation1 [shape = 'u32[144,128]{1,0:T(1,128)}', space=vmem, size = 0x12000, scoped, tag = 'internal scratch']
  %s0 = inlined_call_operand.hbm [shape: f32[2,8,128], index: 0, kind: input, shape index: {}]
  %s1 = inlined_call_operand.hbm [shape: f32[2,8,128], index: 1, kind: input, shape index: {}]
  %s2 = inlined_call_operand.hbm [shape: bf16[128,128], index: 2, kind: input, shape index: {}]
  %s3 = inlined_call_operand.vmem [shape: f32[1,128], index: 3, kind: input, shape index: {}]
  %s4 = inlined_call_operand.hbm [shape: bf16[128,256], index: 4, kind: input, shape index: {}]
  %s5 = inlined_call_operand.vmem [shape: f32[1,256], index: 5, kind: input, shape index: {}]
  %s6 = inlined_call_operand.hbm [shape: bf16[128,128], index: 6, kind: input, shape index: {}]
  %s7 = inlined_call_operand.vmem [shape: f32[1,128], index: 7, kind: input, shape index: {}]
  %s8 = inlined_call_operand.vmem [shape: f32[1,128], index: 8, kind: input, shape index: {}]
  %s9 = inlined_call_operand.vmem [shape: f32[1,128], index: 9, kind: input, shape index: {}]
  %s10 = inlined_call_operand.hbm [shape: bf16[128,128], index: 10, kind: input, shape index: {}]
  %s11 = inlined_call_operand.vmem [shape: f32[1,128], index: 11, kind: input, shape index: {}]
  %s12 = inlined_call_operand.hbm [shape: bf16[128,128], index: 12, kind: input, shape index: {}]
  %s13 = inlined_call_operand.vmem [shape: f32[1,128], index: 13, kind: input, shape index: {}]
  %s14 = inlined_call_operand.vmem [shape: f32[1,128], index: 14, kind: input, shape index: {}]
  %s15 = inlined_call_operand.vmem [shape: f32[1,128], index: 15, kind: input, shape index: {}]
  %s16 = inlined_call_operand.hbm [shape: f32[2,8,128], index: 16, kind: output, shape index: {}]
  %s17 = sld [smem:[#allocation0]]
  $region125: #{tpu_custom_call.1} parent=0
    _
  %s19 = ssub.s32 1, %s17
  %s20 = scalar_select 0, %s19, %s17
  $region1: #{tpu_custom_call.1} parent=0
    #allocation2 [shape = 'u8[8192]{0}', space=vmem, size = 0x2000, scoped, tag = 'input window, operand 0']
    #allocation3 [shape = 's32[2]{0}', space=sflag, size = 0x8, scoped, tag = 'scoped memory for tpu_custom_call.1']
    #allocation4 [shape = 's32[2]{0}', space=sflag, size = 0x8, scoped, tag = 'scoped memory for tpu_custom_call.1']
    #allocation5 [shape = 'u8[8192]{0}', space=vmem, size = 0x2000, scoped, tag = 'input window, operand 1']
    #allocation6 [shape = 's32[2]{0}', space=sflag, size = 0x8, scoped, tag = 'scoped memory for tpu_custom_call.1']
    #allocation7 [shape = 'u8[32768]{0}', space=vmem, size = 0x8000, scoped, tag = 'input window, operand 2, single buffered']
    #allocation8 [shape = 'u8[65536]{0}', space=vmem, size = 0x10000, scoped, tag = 'input window, operand 4, single buffered']
    #allocation9 [shape = 's32[1]{0}', space=sflag, size = 0x4, scoped, tag = 'scoped memory for tpu_custom_call.1']
    #allocation10 [shape = 'u8[32768]{0}', space=vmem, size = 0x8000, scoped, tag = 'input window, operand 6, single buffered']
    #allocation11 [shape = 'u8[32768]{0}', space=vmem, size = 0x8000, scoped, tag = 'input window, operand 10, single buffered']
    #allocation12 [shape = 's32[1]{0}', space=sflag, size = 0x4, scoped, tag = 'scoped memory for tpu_custom_call.1']
    #allocation13 [shape = 'u8[32768]{0}', space=vmem, size = 0x8000, scoped, tag = 'input window, operand 12, single buffered']
    #allocation14 [shape = 'u8[8192]{0}', space=vmem, size = 0x2000, scoped, tag = 'output window, operand 0']
    %21 = vsyncpa [#allocation3], 0
    %s22 = scalar_lea.sflag [#allocation3], 1
    %23 = vsyncpa %s22, 0
    %24 = vsyncpa [#allocation6], 0
    %s25 = scalar_lea.sflag [#allocation6], 1
    %26 = vsyncpa %s25, 0
    %27 = vsyncpa [#allocation9], 0
    %28 = vsyncpa [#allocation12], 0
    %29 = vsyncpa [#allocation4], 0
    %s30 = scalar_lea.sflag [#allocation4], 1
    %31 = vsyncpa %s30, 0
    loop: start=0, step=1, limit=4
    $region2: #{tpu_custom_call.1} parent=1 // loop_pre_header
      _
    $region3: #{tpu_custom_call.1} parent=1 // loop_header
      %s33 = sphi 0, %s37
      %p34 = scmp.ge.s32.totalorder %s33, 4
      %s40 = sphi 0, %s52
      %s41 = sphi 0, %s48
      %s42 = sphi 0, %s40
      %s43 = sphi 0, %s41
      %s44 = sphi 0, %s42
      %s45 = sphi 0, %s43
      %s57 = sphi 0, %s59
      %s60 = sphi 0, %s57
      %s61 = sphi 0, %s60
      %s77 = sphi 0, %s61
      %s83 = sphi 0, %s85
      %s86 = sphi 0, %s83
      %s87 = sphi 0, %s86
      %s103 = sphi 0, %s87
      %s107 = sphi 0, %s107
      %s109 = sphi 0, %s107
      %s110 = sphi 0, %s109
      %s124 = sphi 0, %s110
      %s128 = sphi 0, %s128
      %s130 = sphi 0, %s128
      %s131 = sphi 0, %s130
      %s145 = sphi 0, %s131
      %s149 = sphi 0, %s149
      %s151 = sphi 0, %s149
      %s152 = sphi 0, %s151
      %s166 = sphi 0, %s152
      %s170 = sphi 0, %s170
      %s172 = sphi 0, %s170
      %s173 = sphi 0, %s172
      %s187 = sphi 0, %s173
      %s191 = sphi 0, %s191
      %s193 = sphi 0, %s191
      %s194 = sphi 0, %s193
      %s208 = sphi 0, %s194
      %s212 = sphi 0, %s212
      %s214 = sphi 0, %s212
      %s215 = sphi 0, %s214
      %s229 = sphi 0, %s215
      %s233 = sphi 0, %s233
      %s235 = sphi 0, %s233
      %s236 = sphi 0, %s235
      %s250 = sphi 0, %s236
      %s254 = sphi 0, %s254
      %s256 = sphi 0, %s254
      %s257 = sphi 0, %s256
      %s271 = sphi 0, %s257
      %s275 = sphi 0, %s275
      %s277 = sphi 0, %s275
      %s278 = sphi 0, %s277
      %s292 = sphi 0, %s278
      %s296 = sphi 0, %s296
      %s298 = sphi 0, %s296
      %s299 = sphi 0, %s298
      %s313 = sphi 0, %s299
      %s317 = sphi 0, %s317
      %s319 = sphi 0, %s317
      %s320 = sphi 0, %s319
      %s334 = sphi 0, %s320
      %s338 = sphi 0, %s338
      %s340 = sphi 0, %s338
      %s341 = sphi 0, %s340
      %s355 = sphi 0, %s341
      %s359 = sphi 0, %s359
      %s361 = sphi 0, %s359
      %s362 = sphi 0, %s361
      %s376 = sphi 0, %s362
      %s380 = sphi 0, %s380
      %s382 = sphi 0, %s380
      %s383 = sphi 0, %s382
      %s397 = sphi 0, %s383
      %s405 = sphi 0, %s407
      %s408 = sphi 0, %s405
      %s409 = sphi 0, %s408
      %s425 = sphi 0, %s409
    $region4: #{tpu_custom_call.1} parent=1 // loop_header_branch
      %36 = sbr.rel (%p34) target = $region8
    $region5: #{tpu_custom_call.1} parent=1 // loop_body
      %s38 = ssub.s32 %s33, 1
      %s39 = ssub.s32 %s33, 2
      %s46 = sadd.s32 1, %s41
      %p47 = scmp.ge.s32.totalorder %s46, 1
      %s48 = scalar_select %p47, 0, %s46
      %s49 = sadd.s32 1, %s40
      %s50 = scalar_select %p47, %s49, %s40
      %p51 = scmp.ge.s32.totalorder %s50, 2
      %s52 = scalar_select %p51, 0, %s50
      %s53 = ssub.s32 %s40, %s52
      %s54 = ssub.s32 %s41, %s48
      %s55 = sor.u32 %s53, %s54
      %p56 = scmp.eq.s32.totalorder %s55, 0
      %s58 = sadd.s32 %s57, 1
      %s59 = scalar_select %p56, %s57, %s58
      %p62 = pneg %p56
      %p63 = scmp.eq.s32.totalorder %s33, 1
      %p64 = por %p62, %p63
      %p65 = scmp.ne.s32.totalorder %s57, %s60
      %p66 = scmp.eq.s32.totalorder %s33, 0
      %p67 = por %p65, %p66
      %p68 = scmp.ne.s32.totalorder %s57, %s60
      %p69 = scmp.eq.s32.totalorder %s38, 1
      %p70 = por %p68, %p69
      %p71 = scmp.ne.s32.totalorder %s60, %s61
      %p72 = scmp.eq.s32.totalorder %s38, 0
      %p73 = por %p71, %p72
      %p74 = scmp.ne.s32.totalorder %s60, %s61
      %p75 = scmp.eq.s32.totalorder %s39, 1
      %p76 = por %p74, %p75
      %p78 = scmp.ne.s32.totalorder %s61, %s77
      %p79 = scmp.eq.s32.totalorder %s39, 0
      %p80 = por %p78, %p79
      %s81 = ssub.s32 %s40, %s52
      %p82 = scmp.eq.s32.totalorder %s81, 0
      %s84 = sadd.s32 %s83, 1
      %s85 = scalar_select %p82, %s83, %s84
      %p88 = pneg %p82
      %p89 = scmp.eq.s32.totalorder %s33, 1
      %p90 = por %p88, %p89
      %p91 = scmp.ne.s32.totalorder %s83, %s86
      %p92 = scmp.eq.s32.totalorder %s33, 0
      %p93 = por %p91, %p92
      %p94 = scmp.ne.s32.totalorder %s83, %s86
      %p95 = scmp.eq.s32.totalorder %s38, 1
      %p96 = por %p94, %p95
      %p97 = scmp.ne.s32.totalorder %s86, %s87
      %p98 = scmp.eq.s32.totalorder %s38, 0
      %p99 = por %p97, %p98
      %p100 = scmp.ne.s32.totalorder %s86, %s87
      %p101 = scmp.eq.s32.totalorder %s39, 1
      %p102 = por %p100, %p101
      %p104 = scmp.ne.s32.totalorder %s87, %s103
      %p105 = scmp.eq.s32.totalorder %s39, 0
      %p106 = por %p104, %p105
      %s108 = sadd.s32 %s107, 1
      %p111 = scmp.eq.s32.totalorder %s33, 1
      %p112 = scmp.ne.s32.totalorder %s107, %s109
      %p113 = scmp.eq.s32.totalorder %s33, 0
      %p114 = por %p112, %p113
      %p115 = scmp.ne.s32.totalorder %s107, %s109
      %p116 = scmp.eq.s32.totalorder %s38, 1
      %p117 = por %p115, %p116
      %p118 = scmp.ne.s32.totalorder %s109, %s110
      %p119 = scmp.eq.s32.totalorder %s38, 0
      %p120 = por %p118, %p119
      %p121 = scmp.ne.s32.totalorder %s109, %s110
      %p122 = scmp.eq.s32.totalorder %s39, 1
      %p123 = por %p121, %p122
      %p125 = scmp.ne.s32.totalorder %s110, %s124
      %p126 = scmp.eq.s32.totalorder %s39, 0
      %p127 = por %p125, %p126
      %s129 = sadd.s32 %s128, 1
      %p132 = scmp.eq.s32.totalorder %s33, 1
      %p133 = scmp.ne.s32.totalorder %s128, %s130
      %p134 = scmp.eq.s32.totalorder %s33, 0
      %p135 = por %p133, %p134
      %p136 = scmp.ne.s32.totalorder %s128, %s130
      %p137 = scmp.eq.s32.totalorder %s38, 1
      %p138 = por %p136, %p137
      %p139 = scmp.ne.s32.totalorder %s130, %s131
      %p140 = scmp.eq.s32.totalorder %s38, 0
      %p141 = por %p139, %p140
      %p142 = scmp.ne.s32.totalorder %s130, %s131
      %p143 = scmp.eq.s32.totalorder %s39, 1
      %p144 = por %p142, %p143
      %p146 = scmp.ne.s32.totalorder %s131, %s145
      %p147 = scmp.eq.s32.totalorder %s39, 0
      %p148 = por %p146, %p147
      %s150 = sadd.s32 %s149, 1
      %p153 = scmp.eq.s32.totalorder %s33, 1
      %p154 = scmp.ne.s32.totalorder %s149, %s151
      %p155 = scmp.eq.s32.totalorder %s33, 0
      %p156 = por %p154, %p155
      %p157 = scmp.ne.s32.totalorder %s149, %s151
      %p158 = scmp.eq.s32.totalorder %s38, 1
      %p159 = por %p157, %p158
      %p160 = scmp.ne.s32.totalorder %s151, %s152
      %p161 = scmp.eq.s32.totalorder %s38, 0
      %p162 = por %p160, %p161
      %p163 = scmp.ne.s32.totalorder %s151, %s152
      %p164 = scmp.eq.s32.totalorder %s39, 1
      %p165 = por %p163, %p164
      %p167 = scmp.ne.s32.totalorder %s152, %s166
      %p168 = scmp.eq.s32.totalorder %s39, 0
      %p169 = por %p167, %p168
      %s171 = sadd.s32 %s170, 1
      %p174 = scmp.eq.s32.totalorder %s33, 1
      %p175 = scmp.ne.s32.totalorder %s170, %s172
      %p176 = scmp.eq.s32.totalorder %s33, 0
      %p177 = por %p175, %p176
      %p178 = scmp.ne.s32.totalorder %s170, %s172
      %p179 = scmp.eq.s32.totalorder %s38, 1
      %p180 = por %p178, %p179
      %p181 = scmp.ne.s32.totalorder %s172, %s173
      %p182 = scmp.eq.s32.totalorder %s38, 0
      %p183 = por %p181, %p182
      %p184 = scmp.ne.s32.totalorder %s172, %s173
      %p185 = scmp.eq.s32.totalorder %s39, 1
      %p186 = por %p184, %p185
      %p188 = scmp.ne.s32.totalorder %s173, %s187
      %p189 = scmp.eq.s32.totalorder %s39, 0
      %p190 = por %p188, %p189
      %s192 = sadd.s32 %s191, 1
      %p195 = scmp.eq.s32.totalorder %s33, 1
      %p196 = scmp.ne.s32.totalorder %s191, %s193
      %p197 = scmp.eq.s32.totalorder %s33, 0
      %p198 = por %p196, %p197
      %p199 = scmp.ne.s32.totalorder %s191, %s193
      %p200 = scmp.eq.s32.totalorder %s38, 1
      %p201 = por %p199, %p200
      %p202 = scmp.ne.s32.totalorder %s193, %s194
      %p203 = scmp.eq.s32.totalorder %s38, 0
      %p204 = por %p202, %p203
      %p205 = scmp.ne.s32.totalorder %s193, %s194
      %p206 = scmp.eq.s32.totalorder %s39, 1
      %p207 = por %p205, %p206
      %p209 = scmp.ne.s32.totalorder %s194, %s208
      %p210 = scmp.eq.s32.totalorder %s39, 0
      %p211 = por %p209, %p210
      %s213 = sadd.s32 %s212, 1
      %p216 = scmp.eq.s32.totalorder %s33, 1
      %p217 = scmp.ne.s32.totalorder %s212, %s214
      %p218 = scmp.eq.s32.totalorder %s33, 0
      %p219 = por %p217, %p218
      %p220 = scmp.ne.s32.totalorder %s212, %s214
      %p221 = scmp.eq.s32.totalorder %s38, 1
      %p222 = por %p220, %p221
      %p223 = scmp.ne.s32.totalorder %s214, %s215
      %p224 = scmp.eq.s32.totalorder %s38, 0
      %p225 = por %p223, %p224
      %p226 = scmp.ne.s32.totalorder %s214, %s215
      %p227 = scmp.eq.s32.totalorder %s39, 1
      %p228 = por %p226, %p227
      %p230 = scmp.ne.s32.totalorder %s215, %s229
      %p231 = scmp.eq.s32.totalorder %s39, 0
      %p232 = por %p230, %p231
      %s234 = sadd.s32 %s233, 1
      %p237 = scmp.eq.s32.totalorder %s33, 1
      %p238 = scmp.ne.s32.totalorder %s233, %s235
      %p239 = scmp.eq.s32.totalorder %s33, 0
      %p240 = por %p238, %p239
      %p241 = scmp.ne.s32.totalorder %s233, %s235
      %p242 = scmp.eq.s32.totalorder %s38, 1
      %p243 = por %p241, %p242
      %p244 = scmp.ne.s32.totalorder %s235, %s236
      %p245 = scmp.eq.s32.totalorder %s38, 0
      %p246 = por %p244, %p245
      %p247 = scmp.ne.s32.totalorder %s235, %s236
      %p248 = scmp.eq.s32.totalorder %s39, 1
      %p249 = por %p247, %p248
      %p251 = scmp.ne.s32.totalorder %s236, %s250
      %p252 = scmp.eq.s32.totalorder %s39, 0
      %p253 = por %p251, %p252
      %s255 = sadd.s32 %s254, 1
      %p258 = scmp.eq.s32.totalorder %s33, 1
      %p259 = scmp.ne.s32.totalorder %s254, %s256
      %p260 = scmp.eq.s32.totalorder %s33, 0
      %p261 = por %p259, %p260
      %p262 = scmp.ne.s32.totalorder %s254, %s256
      %p263 = scmp.eq.s32.totalorder %s38, 1
      %p264 = por %p262, %p263
      %p265 = scmp.ne.s32.totalorder %s256, %s257
      %p266 = scmp.eq.s32.totalorder %s38, 0
      %p267 = por %p265, %p266
      %p268 = scmp.ne.s32.totalorder %s256, %s257
      %p269 = scmp.eq.s32.totalorder %s39, 1
      %p270 = por %p268, %p269
      %p272 = scmp.ne.s32.totalorder %s257, %s271
      %p273 = scmp.eq.s32.totalorder %s39, 0
      %p274 = por %p272, %p273
      %s276 = sadd.s32 %s275, 1
      %p279 = scmp.eq.s32.totalorder %s33, 1
      %p280 = scmp.ne.s32.totalorder %s275, %s277
      %p281 = scmp.eq.s32.totalorder %s33, 0
      %p282 = por %p280, %p281
      %p283 = scmp.ne.s32.totalorder %s275, %s277
      %p284 = scmp.eq.s32.totalorder %s38, 1
      %p285 = por %p283, %p284
      %p286 = scmp.ne.s32.totalorder %s277, %s278
      %p287 = scmp.eq.s32.totalorder %s38, 0
      %p288 = por %p286, %p287
      %p289 = scmp.ne.s32.totalorder %s277, %s278
      %p290 = scmp.eq.s32.totalorder %s39, 1
      %p291 = por %p289, %p290
      %p293 = scmp.ne.s32.totalorder %s278, %s292
      %p294 = scmp.eq.s32.totalorder %s39, 0
      %p295 = por %p293, %p294
      %s297 = sadd.s32 %s296, 1
      %p300 = scmp.eq.s32.totalorder %s33, 1
      %p301 = scmp.ne.s32.totalorder %s296, %s298
      %p302 = scmp.eq.s32.totalorder %s33, 0
      %p303 = por %p301, %p302
      %p304 = scmp.ne.s32.totalorder %s296, %s298
      %p305 = scmp.eq.s32.totalorder %s38, 1
      %p306 = por %p304, %p305
      %p307 = scmp.ne.s32.totalorder %s298, %s299
      %p308 = scmp.eq.s32.totalorder %s38, 0
      %p309 = por %p307, %p308
      %p310 = scmp.ne.s32.totalorder %s298, %s299
      %p311 = scmp.eq.s32.totalorder %s39, 1
      %p312 = por %p310, %p311
      %p314 = scmp.ne.s32.totalorder %s299, %s313
      %p315 = scmp.eq.s32.totalorder %s39, 0
      %p316 = por %p314, %p315
      %s318 = sadd.s32 %s317, 1
      %p321 = scmp.eq.s32.totalorder %s33, 1
      %p322 = scmp.ne.s32.totalorder %s317, %s319
      %p323 = scmp.eq.s32.totalorder %s33, 0
      %p324 = por %p322, %p323
      %p325 = scmp.ne.s32.totalorder %s317, %s319
      %p326 = scmp.eq.s32.totalorder %s38, 1
      %p327 = por %p325, %p326
      %p328 = scmp.ne.s32.totalorder %s319, %s320
      %p329 = scmp.eq.s32.totalorder %s38, 0
      %p330 = por %p328, %p329
      %p331 = scmp.ne.s32.totalorder %s319, %s320
      %p332 = scmp.eq.s32.totalorder %s39, 1
      %p333 = por %p331, %p332
      %p335 = scmp.ne.s32.totalorder %s320, %s334
      %p336 = scmp.eq.s32.totalorder %s39, 0
      %p337 = por %p335, %p336
      %s339 = sadd.s32 %s338, 1
      %p342 = scmp.eq.s32.totalorder %s33, 1
      %p343 = scmp.ne.s32.totalorder %s338, %s340
      %p344 = scmp.eq.s32.totalorder %s33, 0
      %p345 = por %p343, %p344
      %p346 = scmp.ne.s32.totalorder %s338, %s340
      %p347 = scmp.eq.s32.totalorder %s38, 1
      %p348 = por %p346, %p347
      %p349 = scmp.ne.s32.totalorder %s340, %s341
      %p350 = scmp.eq.s32.totalorder %s38, 0
      %p351 = por %p349, %p350
      %p352 = scmp.ne.s32.totalorder %s340, %s341
      %p353 = scmp.eq.s32.totalorder %s39, 1
      %p354 = por %p352, %p353
      %p356 = scmp.ne.s32.totalorder %s341, %s355
      %p357 = scmp.eq.s32.totalorder %s39, 0
      %p358 = por %p356, %p357
      %s360 = sadd.s32 %s359, 1
      %p363 = scmp.eq.s32.totalorder %s33, 1
      %p364 = scmp.ne.s32.totalorder %s359, %s361
      %p365 = scmp.eq.s32.totalorder %s33, 0
      %p366 = por %p364, %p365
      %p367 = scmp.ne.s32.totalorder %s359, %s361
      %p368 = scmp.eq.s32.totalorder %s38, 1
      %p369 = por %p367, %p368
      %p370 = scmp.ne.s32.totalorder %s361, %s362
      %p371 = scmp.eq.s32.totalorder %s38, 0
      %p372 = por %p370, %p371
      %p373 = scmp.ne.s32.totalorder %s361, %s362
      %p374 = scmp.eq.s32.totalorder %s39, 1
      %p375 = por %p373, %p374
      %p377 = scmp.ne.s32.totalorder %s362, %s376
      %p378 = scmp.eq.s32.totalorder %s39, 0
      %p379 = por %p377, %p378
      %s381 = sadd.s32 %s380, 1
      %p384 = scmp.eq.s32.totalorder %s33, 1
      %p385 = scmp.ne.s32.totalorder %s380, %s382
      %p386 = scmp.eq.s32.totalorder %s33, 0
      %p387 = por %p385, %p386
      %p388 = scmp.ne.s32.totalorder %s380, %s382
      %p389 = scmp.eq.s32.totalorder %s38, 1
      %p390 = por %p388, %p389
      %p391 = scmp.ne.s32.totalorder %s382, %s383
      %p392 = scmp.eq.s32.totalorder %s38, 0
      %p393 = por %p391, %p392
      %p394 = scmp.ne.s32.totalorder %s382, %s383
      %p395 = scmp.eq.s32.totalorder %s39, 1
      %p396 = por %p394, %p395
      %p398 = scmp.ne.s32.totalorder %s383, %s397
      %p399 = scmp.eq.s32.totalorder %s39, 0
      %p400 = por %p398, %p399
      %s401 = ssub.s32 %s40, %s52
      %s402 = ssub.s32 %s41, %s48
      %s403 = sor.u32 %s401, %s402
      %p404 = scmp.eq.s32.totalorder %s403, 0
      %s406 = sadd.s32 %s405, 1
      %s407 = scalar_select %p404, %s405, %s406
      %p410 = pneg %p404
      %p411 = scmp.eq.s32.totalorder %s33, 1
      %p412 = por %p410, %p411
      %p413 = scmp.ne.s32.totalorder %s405, %s408
      %p414 = scmp.eq.s32.totalorder %s33, 0
      %p415 = por %p413, %p414
      %p416 = scmp.ne.s32.totalorder %s405, %s408
      %p417 = scmp.eq.s32.totalorder %s38, 1
      %p418 = por %p416, %p417
      %p419 = scmp.ne.s32.totalorder %s408, %s409
      %p420 = scmp.eq.s32.totalorder %s38, 0
      %p421 = por %p419, %p420
      %p422 = scmp.ne.s32.totalorder %s408, %s409
      %p423 = scmp.eq.s32.totalorder %s39, 1
      %p424 = por %p422, %p423
      %p426 = scmp.ne.s32.totalorder %s409, %s425
      %p427 = scmp.eq.s32.totalorder %s39, 0
      %p428 = por %p426, %p427
      %p429 = scmp.le.s32.totalorder 1, %s33
      %p430 = scmp.lt.s32.totalorder %s33, 3
      %p431 = pnand %p429, %p430
      %p432 = pneg %p431
      // Predicated region
      $region9: #{tpu_custom_call.1} parent=5 // pred_check
        _
      $region10: #{tpu_custom_call.1} parent=5 // pred_check_branch
        %434 = sbr.rel (%p431) target = $region12
      $region11: #{tpu_custom_call.1} parent=5 // pred_region
        %s435 = ssub.s32 %s33, 1
        // Predicated region
        $region13: #{tpu_custom_call.1} parent=11 // pred_check
          %p436 = pneg %p120
        $region14: #{tpu_custom_call.1} parent=11 // pred_check_branch
          %438 = sbr.rel (%p436) target = $region16
        $region15: #{tpu_custom_call.1} parent=11 // pred_region
          %s440 = ssub.s32 1024, 1024
          %441 = vsyncadd [#allocation6], %s440
          %s442 = sshll.u32 [#allocation7], 4
          %s443 = int_to_ptr.vmem [resolvable:$true] %s442
          %448 = dma.hbm_to_vmem [thread:$0]  %s2, 1024, %s443, [#allocation6], 64, 64, 4
        $region16: #{tpu_custom_call.1} parent=11 // pred_fallthru
          _
        // Predicated region
        $region17: #{tpu_custom_call.1} parent=11 // pred_check
          %p449 = pneg %p141
        $region18: #{tpu_custom_call.1} parent=11 // pred_check_branch
          %451 = sbr.rel (%p449) target = $region20
        $region19: #{tpu_custom_call.1} parent=11 // pred_region
          _
        $region20: #{tpu_custom_call.1} parent=11 // pred_fallthru
          _
        // Predicated region
        $region21: #{tpu_custom_call.1} parent=11 // pred_check
          %p452 = pneg %p162
        $region22: #{tpu_custom_call.1} parent=11 // pred_check_branch
          %454 = sbr.rel (%p452) target = $region24
        $region23: #{tpu_custom_call.1} parent=11 // pred_region
          %s456 = ssub.s32 2048, 2048
          %457 = vsyncadd [#allocation9], %s456
          %s458 = sshll.u32 [#allocation8], 4
          %s459 = int_to_ptr.vmem [resolvable:$true] %s458
          %464 = dma.hbm_to_vmem [thread:$0]  %s4, 2048, %s459, [#allocation9], 128, 128, 8
        $region24: #{tpu_custom_call.1} parent=11 // pred_fallthru
          _
        // Predicated region
        $region25: #{tpu_custom_call.1} parent=11 // pred_check
          %p465 = pneg %p183
        $region26: #{tpu_custom_call.1} parent=11 // pred_check_branch
          %467 = sbr.rel (%p465) target = $region28
        $region27: #{tpu_custom_call.1} parent=11 // pred_region
          _
        $region28: #{tpu_custom_call.1} parent=11 // pred_fallthru
          _
        // Predicated region
        $region29: #{tpu_custom_call.1} parent=11 // pred_check
          %p468 = pneg %p204
        $region30: #{tpu_custom_call.1} parent=11 // pred_check_branch
          %470 = sbr.rel (%p468) target = $region32
        $region31: #{tpu_custom_call.1} parent=11 // pred_region
          %s472 = ssub.s32 1024, 1024
          %473 = vsyncadd [#allocation9], %s472
          %s474 = sshll.u32 [#allocation10], 4
          %s475 = int_to_ptr.vmem [resolvable:$true] %s474
          %480 = dma.hbm_to_vmem [thread:$0]  %s6, 1024, %s475, [#allocation9], 64, 64, 4
        $region32: #{tpu_custom_call.1} parent=11 // pred_fallthru
          _
        // Predicated region
        $region33: #{tpu_custom_call.1} parent=11 // pred_check
          %p481 = pneg %p225
        $region34: #{tpu_custom_call.1} parent=11 // pred_check_branch
          %483 = sbr.rel (%p481) target = $region36
        $region35: #{tpu_custom_call.1} parent=11 // pred_region
          _
        $region36: #{tpu_custom_call.1} parent=11 // pred_fallthru
          _
        // Predicated region
        $region37: #{tpu_custom_call.1} parent=11 // pred_check
          %p484 = pneg %p246
        $region38: #{tpu_custom_call.1} parent=11 // pred_check_branch
          %486 = sbr.rel (%p484) target = $region40
        $region39: #{tpu_custom_call.1} parent=11 // pred_region
          _
        $region40: #{tpu_custom_call.1} parent=11 // pred_fallthru
          _
        // Predicated region
        $region41: #{tpu_custom_call.1} parent=11 // pred_check
          %p487 = pneg %p267
        $region42: #{tpu_custom_call.1} parent=11 // pred_check_branch
          %489 = sbr.rel (%p487) target = $region44
        $region43: #{tpu_custom_call.1} parent=11 // pred_region
          _
        $region44: #{tpu_custom_call.1} parent=11 // pred_fallthru
          _
        // Predicated region
        $region45: #{tpu_custom_call.1} parent=11 // pred_check
          %p490 = pneg %p288
        $region46: #{tpu_custom_call.1} parent=11 // pred_check_branch
          %492 = sbr.rel (%p490) target = $region48
        $region47: #{tpu_custom_call.1} parent=11 // pred_region
          %s494 = ssub.s32 1024, 1024
          %495 = vsyncadd [#allocation12], %s494
          %s496 = sshll.u32 [#allocation11], 4
          %s497 = int_to_ptr.vmem [resolvable:$true] %s496
          %502 = dma.hbm_to_vmem [thread:$0]  %s10, 1024, %s497, [#allocation12], 64, 64, 4
        $region48: #{tpu_custom_call.1} parent=11 // pred_fallthru
          _
        // Predicated region
        $region49: #{tpu_custom_call.1} parent=11 // pred_check
          %p503 = pneg %p309
        $region50: #{tpu_custom_call.1} parent=11 // pred_check_branch
          %505 = sbr.rel (%p503) target = $region52
        $region51: #{tpu_custom_call.1} parent=11 // pred_region
          _
        $region52: #{tpu_custom_call.1} parent=11 // pred_fallthru
          _
        // Predicated region
        $region53: #{tpu_custom_call.1} parent=11 // pred_check
          %p506 = pneg %p330
        $region54: #{tpu_custom_call.1} parent=11 // pred_check_branch
          %508 = sbr.rel (%p506) target = $region56
        $region55: #{tpu_custom_call.1} parent=11 // pred_region
          %s510 = ssub.s32 1024, 1024
          %511 = vsyncadd [#allocation12], %s510
          %s512 = sshll.u32 [#allocation13], 4
          %s513 = int_to_ptr.vmem [resolvable:$true] %s512
          %518 = dma.hbm_to_vmem [thread:$0]  %s12, 1024, %s513, [#allocation12], 64, 64, 4
        $region56: #{tpu_custom_call.1} parent=11 // pred_fallthru
          _
        // Predicated region
        $region57: #{tpu_custom_call.1} parent=11 // pred_check
          %p519 = pneg %p351
        $region58: #{tpu_custom_call.1} parent=11 // pred_check_branch
          %521 = sbr.rel (%p519) target = $region60
        $region59: #{tpu_custom_call.1} parent=11 // pred_region
          _
        $region60: #{tpu_custom_call.1} parent=11 // pred_fallthru
          _
        // Predicated region
        $region61: #{tpu_custom_call.1} parent=11 // pred_check
          %p522 = pneg %p372
        $region62: #{tpu_custom_call.1} parent=11 // pred_check_branch
          %524 = sbr.rel (%p522) target = $region64
        $region63: #{tpu_custom_call.1} parent=11 // pred_region
          _
        $region64: #{tpu_custom_call.1} parent=11 // pred_fallthru
          _
        // Predicated region
        $region65: #{tpu_custom_call.1} parent=11 // pred_check
          %p525 = pneg %p393
        $region66: #{tpu_custom_call.1} parent=11 // pred_check_branch
          %527 = sbr.rel (%p525) target = $region68
        $region67: #{tpu_custom_call.1} parent=11 // pred_region
          _
        $region68: #{tpu_custom_call.1} parent=11 // pred_fallthru
          _
      $region12: #{tpu_custom_call.1} parent=5 // pred_fallthru
        _
      %p528 = scmp.lt.s32.totalorder %s33, 2
      // Predicated region
      $region69: #{tpu_custom_call.1} parent=5 // pred_check
        %p529 = pneg %p528
      $region70: #{tpu_custom_call.1} parent=5 // pred_check_branch
        %531 = sbr.rel (%p529) target = $region72
      $region71: #{tpu_custom_call.1} parent=5 // pred_region
        // Predicated region
        $region73: #{tpu_custom_call.1} parent=71 // pred_check
          %p532 = pneg %p67
        $region74: #{tpu_custom_call.1} parent=71 // pred_check_branch
          %534 = sbr.rel (%p532) target = $region76
        $region75: #{tpu_custom_call.1} parent=71 // pred_region
          %s535 = sand.u32 %s57, 1
          %s536 = scalar_lea.sflag [#allocation3], %s535
          %s537 = sand.u32 %s57, 1
          %s538 = smul.addr %s537, 8
          %s539 = scalar_lea.vmem [#allocation2], %s538
          %s541 = ssub.s32 128, 128
          %542 = vsyncadd %s536, %s541
          %s543 = sadd.s32 %s41, %s40
          %s544 = smul.addr %s543, 128
          %s545 = scalar_lea.hbm %s0, %s544
          %s547 = sshll.u32 %s539, 4
          %s548 = int_to_ptr.vmem [resolvable:$true] %s547
          %550 = dma.hbm_to_vmem [thread:$0]  %s545, 128, %s548, %s536
        $region76: #{tpu_custom_call.1} parent=71 // pred_fallthru
          _
        // Predicated region
        $region77: #{tpu_custom_call.1} parent=71 // pred_check
          %p551 = pneg %p93
        $region78: #{tpu_custom_call.1} parent=71 // pred_check_branch
          %553 = sbr.rel (%p551) target = $region80
        $region79: #{tpu_custom_call.1} parent=71 // pred_region
          %s554 = sand.u32 %s33, 1
          %s555 = scalar_lea.sflag [#allocation6], %s554
          %s556 = sand.u32 %s83, 1
          %s557 = smul.addr %s556, 8
          %s558 = scalar_lea.vmem [#allocation5], %s557
          %s560 = ssub.s32 128, 128
          %561 = vsyncadd %s555, %s560
          %s562 = smul.addr %s40, 128
          %s563 = scalar_lea.hbm %s1, %s562
          %s565 = sshll.u32 %s558, 4
          %s566 = int_to_ptr.vmem [resolvable:$true] %s565
          %568 = dma.hbm_to_vmem [thread:$0]  %s563, 128, %s566, %s555
        $region80: #{tpu_custom_call.1} parent=71 // pred_fallthru
          _
      $region72: #{tpu_custom_call.1} parent=5 // pred_fallthru
        _
      %p569 = scmp.le.s32.totalorder 1, %s33
      %p570 = scmp.lt.s32.totalorder %s33, 3
      %p571 = pnand %p569, %p570
      %p572 = pneg %p571
      // Predicated region
      $region81: #{tpu_custom_call.1} parent=5 // pred_check
        _
      $region82: #{tpu_custom_call.1} parent=5 // pred_check_branch
        %574 = sbr.rel (%p571) target = $region84
      $region83: #{tpu_custom_call.1} parent=5 // pred_region
        %s575 = ssub.s32 %s33, 1
        %s576 = sand.u32 %s60, 1
        %s577 = scalar_lea.sflag [#allocation3], %s576
        %s578 = sand.u32 %s60, 1
        %s579 = smul.addr %s578, 8
        %s580 = scalar_lea.vmem [#allocation2], %s579
        // Predicated region
        $region85: #{tpu_custom_call.1} parent=83 // pred_check
          %p581 = pneg %p73
        $region86: #{tpu_custom_call.1} parent=83 // pred_check_branch
          %583 = sbr.rel (%p581) target = $region88
        $region87: #{tpu_custom_call.1} parent=83 // pred_region
          %584 = dma.done %s577, 128
        $region88: #{tpu_custom_call.1} parent=83 // pred_fallthru
          _
        %s585 = sand.u32 %s38, 1
        %s586 = scalar_lea.sflag [#allocation6], %s585
        %s587 = sand.u32 %s86, 1
        %s588 = smul.addr %s587, 8
        %s589 = scalar_lea.vmem [#allocation5], %s588
        // Predicated region
        $region89: #{tpu_custom_call.1} parent=83 // pred_check
          %p590 = pneg %p99
        $region90: #{tpu_custom_call.1} parent=83 // pred_check_branch
          %592 = sbr.rel (%p590) target = $region92
        $region91: #{tpu_custom_call.1} parent=83 // pred_region
          %593 = dma.done %s586, 128
        $region92: #{tpu_custom_call.1} parent=83 // pred_fallthru
          _
        // Predicated region
        $region93: #{tpu_custom_call.1} parent=83 // pred_check
          %p594 = pneg %p120
        $region94: #{tpu_custom_call.1} parent=83 // pred_check_branch
          %596 = sbr.rel (%p594) target = $region96
        $region95: #{tpu_custom_call.1} parent=83 // pred_region
          %597 = dma.done [#allocation6], 1024
        $region96: #{tpu_custom_call.1} parent=83 // pred_fallthru
          _
        // Predicated region
        $region97: #{tpu_custom_call.1} parent=83 // pred_check
          %p598 = pneg %p162
        $region98: #{tpu_custom_call.1} parent=83 // pred_check_branch
          %600 = sbr.rel (%p598) target = $region100
        $region99: #{tpu_custom_call.1} parent=83 // pred_region
          %601 = dma.done [#allocation9], 2048
        $region100: #{tpu_custom_call.1} parent=83 // pred_fallthru
          _
        // Predicated region
        $region101: #{tpu_custom_call.1} parent=83 // pred_check
          %p602 = pneg %p204
        $region102: #{tpu_custom_call.1} parent=83 // pred_check_branch
          %604 = sbr.rel (%p602) target = $region104
        $region103: #{tpu_custom_call.1} parent=83 // pred_region
          %605 = dma.done [#allocation9], 1024
        $region104: #{tpu_custom_call.1} parent=83 // pred_fallthru
          _
        // Predicated region
        $region105: #{tpu_custom_call.1} parent=83 // pred_check
          %p606 = pneg %p288
        $region106: #{tpu_custom_call.1} parent=83 // pred_check_branch
          %608 = sbr.rel (%p606) target = $region108
        $region107: #{tpu_custom_call.1} parent=83 // pred_region
          %609 = dma.done [#allocation12], 1024
        $region108: #{tpu_custom_call.1} parent=83 // pred_fallthru
          _
        // Predicated region
        $region109: #{tpu_custom_call.1} parent=83 // pred_check
          %p610 = pneg %p330
        $region110: #{tpu_custom_call.1} parent=83 // pred_check_branch
          %612 = sbr.rel (%p610) target = $region112
        $region111: #{tpu_custom_call.1} parent=83 // pred_region
          %613 = dma.done [#allocation12], 1024
        $region112: #{tpu_custom_call.1} parent=83 // pred_fallthru
          _
        %s614 = sand.u32 %s60, 1
        %s615 = scalar_lea.sflag [#allocation3], %s614
        %s616 = sand.u32 %s60, 1
        %s617 = smul.addr %s616, 8
        %s618 = scalar_lea.vmem [#allocation2], %s617
        %p619 = pneg %p73
        %p620 = pneg %p70
        %s621 = sand.u32 %s38, 1
        %s622 = scalar_lea.sflag [#allocation6], %s621
        %s623 = sand.u32 %s86, 1
        %s624 = smul.addr %s623, 8
        %s625 = scalar_lea.vmem [#allocation5], %s624
        %p626 = pneg %p99
        %p627 = pneg %p96
        %p628 = pneg %p120
        %p629 = pneg %p117
        %p630 = pneg %p141
        %p631 = pneg %p138
        %p632 = pneg %p162
        %p633 = pneg %p159
        %p634 = pneg %p183
        %p635 = pneg %p180
        %p636 = pneg %p204
        %p637 = pneg %p201
        %p638 = pneg %p225
        %p639 = pneg %p222
        %p640 = pneg %p246
        %p641 = pneg %p243
        %p642 = pneg %p267
        %p643 = pneg %p264
        %p644 = pneg %p288
        %p645 = pneg %p285
        %p646 = pneg %p309
        %p647 = pneg %p306
        %p648 = pneg %p330
        %p649 = pneg %p327
        %p650 = pneg %p351
        %p651 = pneg %p348
        %p652 = pneg %p372
        %p653 = pneg %p369
        %p654 = pneg %p393
        %p655 = pneg %p390
        %p656 = pneg %p421
        %p657 = pneg %p418
        %s658 = sand.u32 %s408, 1
        %s659 = scalar_lea.sflag [#allocation4], %s658
        %s660 = sand.u32 %s408, 1
        %s661 = smul.addr %s660, 8
        %s662 = scalar_lea.vmem [#allocation14], %s661
        %v664 = vld [vmem:[%s580] sm:$0xff]
        %v665 = vld [vmem:[%s589] sm:$0xff]
        %v666 = vpack.c.bf16 %v664, %v664
        %v667 = vld [vmem:[#allocation7] sm:$0xf]
        %v668 = vld [vmem:[#allocation7 + $0x4] sm:$0xf]
        %v669 = vld [vmem:[#allocation7 + $0x8] sm:$0xf]
        %v670 = vld [vmem:[#allocation7 + $0xc] sm:$0xf]
        %v671 = vld [vmem:[#allocation7 + $0x10] sm:$0xf]
        %v672 = vld [vmem:[#allocation7 + $0x14] sm:$0xf]
        %v673 = vld [vmem:[#allocation7 + $0x18] sm:$0xf]
        %v674 = vld [vmem:[#allocation7 + $0x1c] sm:$0xf]
        %v675 = vld [vmem:[#allocation7 + $0x20] sm:$0xf]
        %v676 = vld [vmem:[#allocation7 + $0x24] sm:$0xf]
        %v677 = vld [vmem:[#allocation7 + $0x28] sm:$0xf]
        %v678 = vld [vmem:[#allocation7 + $0x2c] sm:$0xf]
        %v679 = vld [vmem:[#allocation7 + $0x30] sm:$0xf]
        %v680 = vld [vmem:[#allocation7 + $0x34] sm:$0xf]
        %v681 = vld [vmem:[#allocation7 + $0x38] sm:$0xf]
        %v682 = vld [vmem:[#allocation7 + $0x3c] sm:$0xf]
        %v683 = vld [vmem:[%s3] sm:$0x1]
        %v685 = vlaneseq
        %v686 = vshrl.u32 %v685, 7
        %v687 = vsub.s32 0, %v686
        %v688 = vrot.slane %v683, %v687
        %v706 = vunpack.c.l.b16 %v667
        %v707 = vunpack.c.l.b16 %v668
        %v708 = vunpack.c.l.b16 %v669
        %v709 = vunpack.c.l.b16 %v670
        %v710 = vunpack.c.l.b16 %v671
        %v711 = vunpack.c.l.b16 %v672
        %v712 = vunpack.c.l.b16 %v673
        %v713 = vunpack.c.l.b16 %v674
        %v714 = vunpack.c.l.b16 %v675
        %v715 = vunpack.c.l.b16 %v676
        %v716 = vunpack.c.l.b16 %v677
        %v717 = vunpack.c.l.b16 %v678
        %v718 = vunpack.c.l.b16 %v679
        %v719 = vunpack.c.l.b16 %v680
        %v720 = vunpack.c.l.b16 %v681
        %v721 = vunpack.c.l.b16 %v682
        %v722 = vpack.c.b16 %v707, %v706
        %v723 = vpack.c.b16 %v709, %v708
        %v724 = vpack.c.b16 %v711, %v710
        %v725 = vpack.c.b16 %v713, %v712
        %v726 = vpack.c.b16 %v715, %v714
        %v727 = vpack.c.b16 %v717, %v716
        %v728 = vpack.c.b16 %v719, %v718
        %v729 = vpack.c.b16 %v721, %v720
        %738 = vmatprep.subr.bf16.mxu0 0
        %739 = vmatpush1.bf16.msra.mxu0 %v722
        %740 = vmatprep.subr.bf16.mxu0 0
        %741 = vmatpush1.bf16.msra.mxu0 %v723
        %742 = vmatprep.subr.bf16.mxu0 0
        %743 = vmatpush1.bf16.msra.mxu0 %v724
        %744 = vmatprep.subr.bf16.mxu0 0
        %745 = vmatpush1.bf16.msra.mxu0 %v725
        %746 = vmatprep.subr.bf16.mxu0 0
        %747 = vmatpush1.bf16.msra.mxu0 %v726
        %748 = vmatprep.subr.bf16.mxu0 0
        %749 = vmatpush1.bf16.msra.mxu0 %v727
        %750 = vmatprep.subr.bf16.mxu0 0
        %751 = vmatpush1.bf16.msra.mxu0 %v728
        %752 = vmatprep.subr.bf16.mxu0 0
        %753 = vmatpush1.bf16.msra.mxu0 %v729
        %754 = vmatprep.subr.bf16.mxu0 0
        %755 = vmatpush1.bf16.msra.mxu0 0
        %756 = vmatprep.subr.bf16.mxu0 0
        %757 = vmatpush1.bf16.msra.mxu0 0
        %758 = vmatprep.subr.bf16.mxu0 0
        %759 = vmatpush1.bf16.msra.mxu0 0
        %760 = vmatprep.subr.bf16.mxu0 0
        %761 = vmatpush1.bf16.msra.mxu0 0
        %762 = vmatprep.subr.bf16.mxu0 0
        %763 = vmatpush1.bf16.msra.mxu0 0
        %764 = vmatprep.subr.bf16.mxu0 0
        %765 = vmatpush1.bf16.msra.mxu0 0
        %766 = vmatprep.subr.bf16.mxu0 0
        %767 = vmatpush1.bf16.msra.mxu0 0
        %768 = vmatprep.subr.bf16.mxu0 0
        %769 = vmatpush1.bf16.msra.mxu0 0
        %770 = vmatprep.mubr.bf16.mxu0 0
        %771 = vmatmul.mubr.bf16.gmra.mrb[0].mxu0 %v666
        %v772 = vpop.f32.mrb[0].mxu0
        %v773 = vadd.f32 %v688, %v772
        %v774 = vpop.f32.mrb[0].mxu0
        %v775 = vpop.f32.mrb[0].mxu0
        %v776 = vpop.f32.mrb[0].mxu0
        %777 = vdwg.mxu0
        %v778 = vpack.c.bf16 %v665, %v665
        %v779 = vld [vmem:[#allocation8] sm:$0xff]
        %v780 = vld [vmem:[#allocation8 + $0x8] sm:$0xff]
        %v781 = vld [vmem:[#allocation8 + $0x10] sm:$0xff]
        %v782 = vld [vmem:[#allocation8 + $0x18] sm:$0xff]
        %v783 = vld [vmem:[#allocation8 + $0x20] sm:$0xff]
        %v784 = vld [vmem:[#allocation8 + $0x28] sm:$0xff]
        %v785 = vld [vmem:[#allocation8 + $0x30] sm:$0xff]
        %v786 = vld [vmem:[#allocation8 + $0x38] sm:$0xff]
        %v787 = vld [vmem:[#allocation8 + $0x40] sm:$0xff]
        %v788 = vld [vmem:[#allocation8 + $0x48] sm:$0xff]
        %v789 = vld [vmem:[#allocation8 + $0x50] sm:$0xff]
        %v790 = vld [vmem:[#allocation8 + $0x58] sm:$0xff]
        %v791 = vld [vmem:[#allocation8 + $0x60] sm:$0xff]
        %v792 = vld [vmem:[#allocation8 + $0x68] sm:$0xff]
        %v793 = vld [vmem:[#allocation8 + $0x70] sm:$0xff]
        %v794 = vld [vmem:[#allocation8 + $0x78] sm:$0xff]
        %v795 = vld [vmem:[%s5] sm:$0x3]
        %v797 = vlaneseq
        %v798 = vshrl.u32 %v797, 7
        %v799 = vsub.s32 0, %v798
        %v800 = vrot.slane %v795, %v799
        %v801 = vlaneseq
        %v802 = vshrl.u32 %v801, 7
        %v803 = vsub.s32 1, %v802
        %v804 = vrot.slane %v795, %v803
        %v823 = vunpack.c.l.b16 %v779
        %v824 = vunpack.c.h.b16 %v779
        %v825 = vunpack.c.l.b16 %v780
        %v826 = vunpack.c.h.b16 %v780
        %v827 = vunpack.c.l.b16 %v781
        %v828 = vunpack.c.h.b16 %v781
        %v829 = vunpack.c.l.b16 %v782
        %v830 = vunpack.c.h.b16 %v782
        %v831 = vunpack.c.l.b16 %v783
        %v832 = vunpack.c.h.b16 %v783
        %v833 = vunpack.c.l.b16 %v784
        %v834 = vunpack.c.h.b16 %v784
        %v835 = vunpack.c.l.b16 %v785
        %v836 = vunpack.c.h.b16 %v785
        %v837 = vunpack.c.l.b16 %v786
        %v838 = vunpack.c.h.b16 %v786
        %v839 = vunpack.c.l.b16 %v787
        %v840 = vunpack.c.h.b16 %v787
        %v841 = vunpack.c.l.b16 %v788
        %v842 = vunpack.c.h.b16 %v788
        %v843 = vunpack.c.l.b16 %v789
        %v844 = vunpack.c.h.b16 %v789
        %v845 = vunpack.c.l.b16 %v790
        %v846 = vunpack.c.h.b16 %v790
        %v847 = vunpack.c.l.b16 %v791
        %v848 = vunpack.c.h.b16 %v791
        %v849 = vunpack.c.l.b16 %v792
        %v850 = vunpack.c.h.b16 %v792
        %v851 = vunpack.c.l.b16 %v793
        %v852 = vunpack.c.h.b16 %v793
        %v853 = vunpack.c.l.b16 %v794
        %v854 = vunpack.c.h.b16 %v794
        %v855 = vpack.c.b16 %v825, %v823
        %v856 = vpack.c.b16 %v826, %v824
        %v857 = vpack.c.b16 %v829, %v827
        %v858 = vpack.c.b16 %v830, %v828
        %v859 = vpack.c.b16 %v833, %v831
        %v860 = vpack.c.b16 %v834, %v832
        %v861 = vpack.c.b16 %v837, %v835
        %v862 = vpack.c.b16 %v838, %v836
        %v863 = vpack.c.b16 %v841, %v839
        %v864 = vpack.c.b16 %v842, %v840
        %v865 = vpack.c.b16 %v845, %v843
        %v866 = vpack.c.b16 %v846, %v844
        %v867 = vpack.c.b16 %v849, %v847
        %v868 = vpack.c.b16 %v850, %v848
        %v869 = vpack.c.b16 %v853, %v851
        %v870 = vpack.c.b16 %v854, %v852
        %887 = vmatprep.subr.bf16.mxu0 %v856
        %888 = vmatpush1.bf16.msra.mxu0 %v855
        %889 = vmatprep.subr.bf16.mxu0 %v858
        %890 = vmatpush1.bf16.msra.mxu0 %v857
        %891 = vmatprep.subr.bf16.mxu0 %v860
        %892 = vmatpush1.bf16.msra.mxu0 %v859
        %893 = vmatprep.subr.bf16.mxu0 %v862
        %894 = vmatpush1.bf16.msra.mxu0 %v861
        %895 = vmatprep.subr.bf16.mxu0 %v864
        %896 = vmatpush1.bf16.msra.mxu0 %v863
        %897 = vmatprep.subr.bf16.mxu0 %v866
        %898 = vmatpush1.bf16.msra.mxu0 %v865
        %899 = vmatprep.subr.bf16.mxu0 %v868
        %900 = vmatpush1.bf16.msra.mxu0 %v867
        %901 = vmatprep.subr.bf16.mxu0 %v870
        %902 = vmatpush1.bf16.msra.mxu0 %v869
        %903 = vmatprep.subr.bf16.mxu0 0
        %904 = vmatpush1.bf16.msra.mxu0 0
        %905 = vmatprep.subr.bf16.mxu0 0
        %906 = vmatpush1.bf16.msra.mxu0 0
        %907 = vmatprep.subr.bf16.mxu0 0
        %908 = vmatpush1.bf16.msra.mxu0 0
        %909 = vmatprep.subr.bf16.mxu0 0
        %910 = vmatpush1.bf16.msra.mxu0 0
        %911 = vmatprep.subr.bf16.mxu0 0
        %912 = vmatpush1.bf16.msra.mxu0 0
        %913 = vmatprep.subr.bf16.mxu0 0
        %914 = vmatpush1.bf16.msra.mxu0 0
        %915 = vmatprep.subr.bf16.mxu0 0
        %916 = vmatpush1.bf16.msra.mxu0 0
        %917 = vmatprep.subr.bf16.mxu0 0
        %918 = vmatpush1.bf16.msra.mxu0 0
        %919 = vmatprep.mubr.bf16.mxu0 0
        %920 = vmatmul.mubr.bf16.gmra.mrb[0].mxu0 %v778
        %v921 = vpop.f32.mrb[0].mxu0
        %v922 = vadd.f32 %v800, %v921
        %v923 = vpop.f32.mrb[0].mxu0
        %v924 = vadd.f32 %v804, %v923
        %v925 = vpop.f32.mrb[0].mxu0
        %v926 = vpop.f32.mrb[0].mxu0
        %927 = vdwg.mxu0
        %928 = vxpose.xlu0.b32.start [1/16] %v773, 128
        %929 = vxpose.xlu0.b32.cont [2/16] 0.0, 128
        %930 = vxpose.xlu0.b32.cont [3/16] 0.0, 128
        %931 = vxpose.xlu0.b32.cont [4/16] 0.0, 128
        %932 = vxpose.xlu0.b32.cont [5/16] 0.0, 128
        %933 = vxpose.xlu0.b32.cont [6/16] 0.0, 128
        %934 = vxpose.xlu0.b32.cont [7/16] 0.0, 128
        %935 = vxpose.xlu0.b32.cont [8/16] 0.0, 128
        %936 = vxpose.xlu0.b32.cont [9/16] 0.0, 128
        %937 = vxpose.xlu0.b32.cont [10/16] 0.0, 128
        %938 = vxpose.xlu0.b32.cont [11/16] 0.0, 128
        %939 = vxpose.xlu0.b32.cont [12/16] 0.0, 128
        %940 = vxpose.xlu0.b32.cont [13/16] 0.0, 128
        %941 = vxpose.xlu0.b32.cont [14/16] 0.0, 128
        %942 = vxpose.xlu0.b32.cont [15/16] 0.0, 128
        %943 = vxpose.xlu0.b32.end [16/16] 0.0, 128
        %v944 = vpop.trf.xlu0
        %v945 = vpop.trf.xlu0
        %v946 = vpop.trf.xlu0
        %v947 = vpop.trf.xlu0
        %v948 = vpop.trf.xlu0
        %v949 = vpop.trf.xlu0
        %v950 = vpop.trf.xlu0
        %v951 = vpop.trf.xlu0
        %v952 = vpop.trf.xlu0
        %v953 = vpop.trf.xlu0
        %v954 = vpop.trf.xlu0
        %v955 = vpop.trf.xlu0
        %v956 = vpop.trf.xlu0
        %v957 = vpop.trf.xlu0
        %v958 = vpop.trf.xlu0
        %v959 = vpop.trf.xlu0
        %960 = vxpose.xlu0.b32.start [1/16] %v944, 128
        %961 = vxpose.xlu0.b32.cont [2/16] %v945, 128
        %962 = vxpose.xlu0.b32.cont [3/16] %v946, 128
        %963 = vxpose.xlu0.b32.cont [4/16] %v947, 128
        %964 = vxpose.xlu0.b32.cont [5/16] 0.0, 128
        %965 = vxpose.xlu0.b32.cont [6/16] 0.0, 128
        %966 = vxpose.xlu0.b32.cont [7/16] 0.0, 128
        %967 = vxpose.xlu0.b32.cont [8/16] 0.0, 128
        %968 = vxpose.xlu0.b32.cont [9/16] 0.0, 128
        %969 = vxpose.xlu0.b32.cont [10/16] 0.0, 128
        %970 = vxpose.xlu0.b32.cont [11/16] 0.0, 128
        %971 = vxpose.xlu0.b32.cont [12/16] 0.0, 128
        %972 = vxpose.xlu0.b32.cont [13/16] 0.0, 128
        %973 = vxpose.xlu0.b32.cont [14/16] 0.0, 128
        %974 = vxpose.xlu0.b32.cont [15/16] 0.0, 128
        %975 = vxpose.xlu0.b32.end [16/16] 0.0, 128
        %v976 = vpop.trf.xlu0
        %v977 = vpop.trf.xlu0
        %v978 = vpop.trf.xlu0
        %v979 = vpop.trf.xlu0
        %v980 = vpop.trf.xlu0
        %v981 = vpop.trf.xlu0
        %v982 = vpop.trf.xlu0
        %v983 = vpop.trf.xlu0
        %v984 = vpop.trf.xlu0
        %v985 = vpop.trf.xlu0
        %v986 = vpop.trf.xlu0
        %v987 = vpop.trf.xlu0
        %v988 = vpop.trf.xlu0
        %v989 = vpop.trf.xlu0
        %v990 = vpop.trf.xlu0
        %v991 = vpop.trf.xlu0
        %992 = vxpose.xlu0.b32.start [1/16] %v948, 128
        %993 = vxpose.xlu0.b32.cont [2/16] %v949, 128
        %994 = vxpose.xlu0.b32.cont [3/16] %v950, 128
        %995 = vxpose.xlu0.b32.cont [4/16] %v951, 128
        %996 = vxpose.xlu0.b32.cont [5/16] 0.0, 128
        %997 = vxpose.xlu0.b32.cont [6/16] 0.0, 128
        %998 = vxpose.xlu0.b32.cont [7/16] 0.0, 128
        %999 = vxpose.xlu0.b32.cont [8/16] 0.0, 128
        %1000 = vxpose.xlu0.b32.cont [9/16] 0.0, 128
        %1001 = vxpose.xlu0.b32.cont [10/16] 0.0, 128
        %1002 = vxpose.xlu0.b32.cont [11/16] 0.0, 128
        %1003 = vxpose.xlu0.b32.cont [12/16] 0.0, 128
        %1004 = vxpose.xlu0.b32.cont [13/16] 0.0, 128
        %1005 = vxpose.xlu0.b32.cont [14/16] 0.0, 128
        %1006 = vxpose.xlu0.b32.cont [15/16] 0.0, 128
        %1007 = vxpose.xlu0.b32.end [16/16] 0.0, 128
        %v1008 = vpop.trf.xlu0
        %v1009 = vpop.trf.xlu0
        %v1010 = vpop.trf.xlu0
        %v1011 = vpop.trf.xlu0
        %v1012 = vpop.trf.xlu0
        %v1013 = vpop.trf.xlu0
        %v1014 = vpop.trf.xlu0
        %v1015 = vpop.trf.xlu0
        %v1016 = vpop.trf.xlu0
        %v1017 = vpop.trf.xlu0
        %v1018 = vpop.trf.xlu0
        %v1019 = vpop.trf.xlu0
        %v1020 = vpop.trf.xlu0
        %v1021 = vpop.trf.xlu0
        %v1022 = vpop.trf.xlu0
        %v1023 = vpop.trf.xlu0
        %1024 = vxpose.xlu0.b32.start [1/16] %v952, 128
        %1025 = vxpose.xlu0.b32.cont [2/16] %v953, 128
        %1026 = vxpose.xlu0.b32.cont [3/16] %v954, 128
        %1027 = vxpose.xlu0.b32.cont [4/16] %v955, 128
        %1028 = vxpose.xlu0.b32.cont [5/16] 0.0, 128
        %1029 = vxpose.xlu0.b32.cont [6/16] 0.0, 128
        %1030 = vxpose.xlu0.b32.cont [7/16] 0.0, 128
        %1031 = vxpose.xlu0.b32.cont [8/16] 0.0, 128
        %1032 = vxpose.xlu0.b32.cont [9/16] 0.0, 128
        %1033 = vxpose.xlu0.b32.cont [10/16] 0.0, 128
        %1034 = vxpose.xlu0.b32.cont [11/16] 0.0, 128
        %1035 = vxpose.xlu0.b32.cont [12/16] 0.0, 128
        %1036 = vxpose.xlu0.b32.cont [13/16] 0.0, 128
        %1037 = vxpose.xlu0.b32.cont [14/16] 0.0, 128
        %1038 = vxpose.xlu0.b32.cont [15/16] 0.0, 128
        %1039 = vxpose.xlu0.b32.end [16/16] 0.0, 128
        %v1040 = vpop.trf.xlu0
        %v1041 = vpop.trf.xlu0
        %v1042 = vpop.trf.xlu0
        %v1043 = vpop.trf.xlu0
        %v1044 = vpop.trf.xlu0
        %v1045 = vpop.trf.xlu0
        %v1046 = vpop.trf.xlu0
        %v1047 = vpop.trf.xlu0
        %v1048 = vpop.trf.xlu0
        %v1049 = vpop.trf.xlu0
        %v1050 = vpop.trf.xlu0
        %v1051 = vpop.trf.xlu0
        %v1052 = vpop.trf.xlu0
        %v1053 = vpop.trf.xlu0
        %v1054 = vpop.trf.xlu0
        %v1055 = vpop.trf.xlu0
        %1056 = vxpose.xlu0.b32.start [1/16] %v956, 128
        %1057 = vxpose.xlu0.b32.cont [2/16] %v957, 128
        %1058 = vxpose.xlu0.b32.cont [3/16] %v958, 128
        %1059 = vxpose.xlu0.b32.cont [4/16] %v959, 128
        %1060 = vxpose.xlu0.b32.cont [5/16] 0.0, 128
        %1061 = vxpose.xlu0.b32.cont [6/16] 0.0, 128
        %1062 = vxpose.xlu0.b32.cont [7/16] 0.0, 128
        %1063 = vxpose.xlu0.b32.cont [8/16] 0.0, 128
        %1064 = vxpose.xlu0.b32.cont [9/16] 0.0, 128
        %1065 = vxpose.xlu0.b32.cont [10/16] 0.0, 128
        %1066 = vxpose.xlu0.b32.cont [11/16] 0.0, 128
        %1067 = vxpose.xlu0.b32.cont [12/16] 0.0, 128
        %1068 = vxpose.xlu0.b32.cont [13/16] 0.0, 128
        %1069 = vxpose.xlu0.b32.cont [14/16] 0.0, 128
        %1070 = vxpose.xlu0.b32.cont [15/16] 0.0, 128
        %1071 = vxpose.xlu0.b32.end [16/16] 0.0, 128
        %v1072 = vpop.trf.xlu0
        %v1073 = vpop.trf.xlu0
        %v1074 = vpop.trf.xlu0
        %v1075 = vpop.trf.xlu0
        %v1076 = vpop.trf.xlu0
        %v1077 = vpop.trf.xlu0
        %v1078 = vpop.trf.xlu0
        %v1079 = vpop.trf.xlu0
        %v1080 = vpop.trf.xlu0
        %v1081 = vpop.trf.xlu0
        %v1082 = vpop.trf.xlu0
        %v1083 = vpop.trf.xlu0
        %v1084 = vpop.trf.xlu0
        %v1085 = vpop.trf.xlu0
        %v1086 = vpop.trf.xlu0
        %v1087 = vpop.trf.xlu0
        %v1088 = vpack.c.bf16 %v976, %v976
        %v1089 = vpack.c.bf16 %v1008, %v1008
        %v1090 = vpack.c.bf16 %v1040, %v1040
        %v1091 = vpack.c.bf16 %v1072, %v1072
        %1092 = vxpose.xlu0.b32.start [1/16] %v922, 128
        %1093 = vxpose.xlu0.b32.cont [2/16] 0.0, 128
        %1094 = vxpose.xlu0.b32.cont [3/16] 0.0, 128
        %1095 = vxpose.xlu0.b32.cont [4/16] 0.0, 128
        %1096 = vxpose.xlu0.b32.cont [5/16] 0.0, 128
        %1097 = vxpose.xlu0.b32.cont [6/16] 0.0, 128
        %1098 = vxpose.xlu0.b32.cont [7/16] 0.0, 128
        %1099 = vxpose.xlu0.b32.cont [8/16] 0.0, 128
        %1100 = vxpose.xlu0.b32.cont [9/16] 0.0, 128
        %1101 = vxpose.xlu0.b32.cont [10/16] 0.0, 128
        %1102 = vxpose.xlu0.b32.cont [11/16] 0.0, 128
        %1103 = vxpose.xlu0.b32.cont [12/16] 0.0, 128
        %1104 = vxpose.xlu0.b32.cont [13/16] 0.0, 128
        %1105 = vxpose.xlu0.b32.cont [14/16] 0.0, 128
        %1106 = vxpose.xlu0.b32.cont [15/16] 0.0, 128
        %1107 = vxpose.xlu0.b32.end [16/16] 0.0, 128
        %v1108 = vpop.trf.xlu0
        %v1109 = vpop.trf.xlu0
        %v1110 = vpop.trf.xlu0
        %v1111 = vpop.trf.xlu0
        %v1112 = vpop.trf.xlu0
        %v1113 = vpop.trf.xlu0
        %v1114 = vpop.trf.xlu0
        %v1115 = vpop.trf.xlu0
        %v1116 = vpop.trf.xlu0
        %v1117 = vpop.trf.xlu0
        %v1118 = vpop.trf.xlu0
        %v1119 = vpop.trf.xlu0
        %v1120 = vpop.trf.xlu0
        %v1121 = vpop.trf.xlu0
        %v1122 = vpop.trf.xlu0
        %v1123 = vpop.trf.xlu0
        %1124 = vxpose.xlu0.b32.start [1/16] %v924, 128
        %1125 = vxpose.xlu0.b32.cont [2/16] 0.0, 128
        %1126 = vxpose.xlu0.b32.cont [3/16] 0.0, 128
        %1127 = vxpose.xlu0.b32.cont [4/16] 0.0, 128
        %1128 = vxpose.xlu0.b32.cont [5/16] 0.0, 128
        %1129 = vxpose.xlu0.b32.cont [6/16] 0.0, 128
        %1130 = vxpose.xlu0.b32.cont [7/16] 0.0, 128
        %1131 = vxpose.xlu0.b32.cont [8/16] 0.0, 128
        %1132 = vxpose.xlu0.b32.cont [9/16] 0.0, 128
        %1133 = vxpose.xlu0.b32.cont [10/16] 0.0, 128
        %1134 = vxpose.xlu0.b32.cont [11/16] 0.0, 128
        %1135 = vxpose.xlu0.b32.cont [12/16] 0.0, 128
        %1136 = vxpose.xlu0.b32.cont [13/16] 0.0, 128
        %1137 = vxpose.xlu0.b32.cont [14/16] 0.0, 128
        %1138 = vxpose.xlu0.b32.cont [15/16] 0.0, 128
        %1139 = vxpose.xlu0.b32.end [16/16] 0.0, 128
        %v1140 = vpop.trf.xlu0
        %v1141 = vpop.trf.xlu0
        %v1142 = vpop.trf.xlu0
        %v1143 = vpop.trf.xlu0
        %v1144 = vpop.trf.xlu0
        %v1145 = vpop.trf.xlu0
        %v1146 = vpop.trf.xlu0
        %v1147 = vpop.trf.xlu0
        %v1148 = vpop.trf.xlu0
        %v1149 = vpop.trf.xlu0
        %v1150 = vpop.trf.xlu0
        %v1151 = vpop.trf.xlu0
        %v1152 = vpop.trf.xlu0
        %v1153 = vpop.trf.xlu0
        %v1154 = vpop.trf.xlu0
        %v1155 = vpop.trf.xlu0
        %v1156 = vpack.c.bf16 %v1109, %v1108
        %v1157 = vpack.c.bf16 %v1111, %v1110
        %v1158 = vpack.c.bf16 %v1113, %v1112
        %v1159 = vpack.c.bf16 %v1115, %v1114
        %v1160 = vpack.c.bf16 %v1117, %v1116
        %v1161 = vpack.c.bf16 %v1119, %v1118
        %v1162 = vpack.c.bf16 %v1121, %v1120
        %v1163 = vpack.c.bf16 %v1123, %v1122
        %v1164 = vpack.c.bf16 %v1141, %v1140
        %v1165 = vpack.c.bf16 %v1143, %v1142
        %v1166 = vpack.c.bf16 %v1145, %v1144
        %v1167 = vpack.c.bf16 %v1147, %v1146
        %v1168 = vpack.c.bf16 %v1149, %v1148
        %v1169 = vpack.c.bf16 %v1151, %v1150
        %v1170 = vpack.c.bf16 %v1153, %v1152
        %v1171 = vpack.c.bf16 %v1155, %v1154
        %vm1172 = vcmask 261120
        %v1174 = vsel %vm1172, %v1088, 0
        %1176 = vmatprep.subr.bf16.mxu0 0
        %1177 = vmatpush1.bf16.msra.mxu0 %v1156
        %1178 = vmatprep.subr.bf16.mxu0 0
        %1179 = vmatpush1.bf16.msra.mxu0 %v1157
        %1180 = vmatprep.subr.bf16.mxu0 0
        %1181 = vmatpush1.bf16.msra.mxu0 0
        %1182 = vmatprep.subr.bf16.mxu0 0
        %1183 = vmatpush1.bf16.msra.mxu0 0
        %1184 = vmatprep.subr.bf16.mxu0 0
        %1185 = vmatpush1.bf16.msra.mxu0 0
        %1186 = vmatprep.subr.bf16.mxu0 0
        %1187 = vmatpush1.bf16.msra.mxu0 0
        %1188 = vmatprep.subr.bf16.mxu0 0
        %1189 = vmatpush1.bf16.msra.mxu0 0
        %1190 = vmatprep.subr.bf16.mxu0 0
        %1191 = vmatpush1.bf16.msra.mxu0 0
        %1192 = vmatprep.subr.bf16.mxu0 0
        %1193 = vmatpush1.bf16.msra.mxu0 0
        %1194 = vmatprep.subr.bf16.mxu0 0
        %1195 = vmatpush1.bf16.msra.mxu0 0
        %1196 = vmatprep.subr.bf16.mxu0 0
        %1197 = vmatpush1.bf16.msra.mxu0 0
        %1198 = vmatprep.subr.bf16.mxu0 0
        %1199 = vmatpush1.bf16.msra.mxu0 0
        %1200 = vmatprep.subr.bf16.mxu0 0
        %1201 = vmatpush1.bf16.msra.mxu0 0
        %1202 = vmatprep.subr.bf16.mxu0 0
        %1203 = vmatpush1.bf16.msra.mxu0 0
        %1204 = vmatprep.subr.bf16.mxu0 0
        %1205 = vmatpush1.bf16.msra.mxu0 0
        %1206 = vmatprep.subr.bf16.mxu0 0
        %1207 = vmatpush1.bf16.msra.mxu0 0
        %1208 = vmatprep.mubr.bf16.mxu0 0
        %1209 = vmatmul.mubr.bf16.gmra.mrb[0].mxu0 %v1174
        %v1210 = vpop.f32.mrb[0].mxu0
        %v1211 = vadd.f32 0.0, %v1210
        %v1212 = vpop.f32.mrb[0].mxu0
        %v1213 = vpop.f32.mrb[0].mxu0
        %v1214 = vpop.f32.mrb[0].mxu0
        %1215 = vdwg.mxu0
        %v1217 = vsel %vm1172, %v1089, 0
        %1219 = vmatprep.subr.bf16.mxu0 0
        %1220 = vmatpush1.bf16.msra.mxu0 %v1158
        %1221 = vmatprep.subr.bf16.mxu0 0
        %1222 = vmatpush1.bf16.msra.mxu0 %v1159
        %1223 = vmatprep.subr.bf16.mxu0 0
        %1224 = vmatpush1.bf16.msra.mxu0 0
        %1225 = vmatprep.subr.bf16.mxu0 0
        %1226 = vmatpush1.bf16.msra.mxu0 0
        %1227 = vmatprep.subr.bf16.mxu0 0
        %1228 = vmatpush1.bf16.msra.mxu0 0
        %1229 = vmatprep.subr.bf16.mxu0 0
        %1230 = vmatpush1.bf16.msra.mxu0 0
        %1231 = vmatprep.subr.bf16.mxu0 0
        %1232 = vmatpush1.bf16.msra.mxu0 0
        %1233 = vmatprep.subr.bf16.mxu0 0
        %1234 = vmatpush1.bf16.msra.mxu0 0
        %1235 = vmatprep.subr.bf16.mxu0 0
        %1236 = vmatpush1.bf16.msra.mxu0 0
        %1237 = vmatprep.subr.bf16.mxu0 0
        %1238 = vmatpush1.bf16.msra.mxu0 0
        %1239 = vmatprep.subr.bf16.mxu0 0
        %1240 = vmatpush1.bf16.msra.mxu0 0
        %1241 = vmatprep.subr.bf16.mxu0 0
        %1242 = vmatpush1.bf16.msra.mxu0 0
        %1243 = vmatprep.subr.bf16.mxu0 0
        %1244 = vmatpush1.bf16.msra.mxu0 0
        %1245 = vmatprep.subr.bf16.mxu0 0
        %1246 = vmatpush1.bf16.msra.mxu0 0
        %1247 = vmatprep.subr.bf16.mxu0 0
        %1248 = vmatpush1.bf16.msra.mxu0 0
        %1249 = vmatprep.subr.bf16.mxu0 0
        %1250 = vmatpush1.bf16.msra.mxu0 0
        %1251 = vmatprep.mubr.bf16.mxu0 0
        %1252 = vmatmul.mubr.bf16.gmra.mrb[0].mxu0 %v1217
        %v1253 = vpop.f32.mrb[0].mxu0
        %v1254 = vadd.f32 0.0, %v1253
        %v1255 = vpop.f32.mrb[0].mxu0
        %v1256 = vpop.f32.mrb[0].mxu0
        %v1257 = vpop.f32.mrb[0].mxu0
        %1258 = vdwg.mxu0
        %v1260 = vsel %vm1172, %v1090, 0
        %1262 = vmatprep.subr.bf16.mxu0 0
        %1263 = vmatpush1.bf16.msra.mxu0 %v1160
        %1264 = vmatprep.subr.bf16.mxu0 0
        %1265 = vmatpush1.bf16.msra.mxu0 %v1161
        %1266 = vmatprep.subr.bf16.mxu0 0
        %1267 = vmatpush1.bf16.msra.mxu0 0
        %1268 = vmatprep.subr.bf16.mxu0 0
        %1269 = vmatpush1.bf16.msra.mxu0 0
        %1270 = vmatprep.subr.bf16.mxu0 0
        %1271 = vmatpush1.bf16.msra.mxu0 0
        %1272 = vmatprep.subr.bf16.mxu0 0
        %1273 = vmatpush1.bf16.msra.mxu0 0
        %1274 = vmatprep.subr.bf16.mxu0 0
        %1275 = vmatpush1.bf16.msra.mxu0 0
        %1276 = vmatprep.subr.bf16.mxu0 0
        %1277 = vmatpush1.bf16.msra.mxu0 0
        %1278 = vmatprep.subr.bf16.mxu0 0
        %1279 = vmatpush1.bf16.msra.mxu0 0
        %1280 = vmatprep.subr.bf16.mxu0 0
        %1281 = vmatpush1.bf16.msra.mxu0 0
        %1282 = vmatprep.subr.bf16.mxu0 0
        %1283 = vmatpush1.bf16.msra.mxu0 0
        %1284 = vmatprep.subr.bf16.mxu0 0
        %1285 = vmatpush1.bf16.msra.mxu0 0
        %1286 = vmatprep.subr.bf16.mxu0 0
        %1287 = vmatpush1.bf16.msra.mxu0 0
        %1288 = vmatprep.subr.bf16.mxu0 0
        %1289 = vmatpush1.bf16.msra.mxu0 0
        %1290 = vmatprep.subr.bf16.mxu0 0
        %1291 = vmatpush1.bf16.msra.mxu0 0
        %1292 = vmatprep.subr.bf16.mxu0 0
        %1293 = vmatpush1.bf16.msra.mxu0 0
        %1294 = vmatprep.mubr.bf16.mxu0 0
        %1295 = vmatmul.mubr.bf16.gmra.mrb[0].mxu0 %v1260
        %v1296 = vpop.f32.mrb[0].mxu0
        %v1297 = vadd.f32 0.0, %v1296
        %v1298 = vpop.f32.mrb[0].mxu0
        %v1299 = vpop.f32.mrb[0].mxu0
        %v1300 = vpop.f32.mrb[0].mxu0
        %1301 = vdwg.mxu0
        %v1303 = vsel %vm1172, %v1091, 0
        %1305 = vmatprep.subr.bf16.mxu0 0
        %1306 = vmatpush1.bf16.msra.mxu0 %v1162
        %1307 = vmatprep.subr.bf16.mxu0 0
        %1308 = vmatpush1.bf16.msra.mxu0 %v1163
        %1309 = vmatprep.subr.bf16.mxu0 0
        %1310 = vmatpush1.bf16.msra.mxu0 0
        %1311 = vmatprep.subr.bf16.mxu0 0
        %1312 = vmatpush1.bf16.msra.mxu0 0
        %1313 = vmatprep.subr.bf16.mxu0 0
        %1314 = vmatpush1.bf16.msra.mxu0 0
        %1315 = vmatprep.subr.bf16.mxu0 0
        %1316 = vmatpush1.bf16.msra.mxu0 0
        %1317 = vmatprep.subr.bf16.mxu0 0
        %1318 = vmatpush1.bf16.msra.mxu0 0
        %1319 = vmatprep.subr.bf16.mxu0 0
        %1320 = vmatpush1.bf16.msra.mxu0 0
        %1321 = vmatprep.subr.bf16.mxu0 0
        %1322 = vmatpush1.bf16.msra.mxu0 0
        %1323 = vmatprep.subr.bf16.mxu0 0
        %1324 = vmatpush1.bf16.msra.mxu0 0
        %1325 = vmatprep.subr.bf16.mxu0 0
        %1326 = vmatpush1.bf16.msra.mxu0 0
        %1327 = vmatprep.subr.bf16.mxu0 0
        %1328 = vmatpush1.bf16.msra.mxu0 0
        %1329 = vmatprep.subr.bf16.mxu0 0
        %1330 = vmatpush1.bf16.msra.mxu0 0
        %1331 = vmatprep.subr.bf16.mxu0 0
        %1332 = vmatpush1.bf16.msra.mxu0 0
        %1333 = vmatprep.subr.bf16.mxu0 0
        %1334 = vmatpush1.bf16.msra.mxu0 0
        %1335 = vmatprep.subr.bf16.mxu0 0
        %1336 = vmatpush1.bf16.msra.mxu0 0
        %1337 = vmatprep.mubr.bf16.mxu0 0
        %1338 = vmatmul.mubr.bf16.gmra.mrb[0].mxu0 %v1303
        %v1339 = vpop.f32.mrb[0].mxu0
        %v1340 = vadd.f32 0.0, %v1339
        %v1341 = vpop.f32.mrb[0].mxu0
        %v1342 = vpop.f32.mrb[0].mxu0
        %v1343 = vpop.f32.mrb[0].mxu0
        %1344 = vdwg.mxu0
        %vm1345 = vcmask 64512
        %v1346 = vsel %vm1345, %v1211, -inf
        %1347 = vmax.xlane.f32.xlu0 %v1346
        %v1348 = vpop.xlane.xlu0 %1347
        %v1349 = vsel %vm1345, %v1254, -inf
        %1350 = vmax.xlane.f32.xlu0 %v1349
        %v1351 = vpop.xlane.xlu0 %1350
        %v1352 = vsel %vm1345, %v1297, -inf
        %1353 = vmax.xlane.f32.xlu0 %v1352
        %v1354 = vpop.xlane.xlu0 %1353
        %v1355 = vsel %vm1345, %v1340, -inf
        %1356 = vmax.xlane.f32.xlu0 %v1355
        %v1357 = vpop.xlane.xlu0 %1356
        %v1358 = vsub.f32 %v1211, %v1348
        %v1359 = vsub.f32 %v1254, %v1351
        %v1360 = vsub.f32 %v1297, %v1354
        %v1361 = vsub.f32 %v1340, %v1357
        %v1362 = vmul.f32 %v1358, 1.442695
        %v1363 = vpow.pop %v1362
        %v1364 = vmul.f32 %v1359, 1.442695
        %v1365 = vpow.pop %v1364
        %v1366 = vmul.f32 %v1360, 1.442695
        %v1367 = vpow.pop %v1366
        %v1368 = vmul.f32 %v1361, 1.442695
        %v1369 = vpow.pop %v1368
        %v1370 = vsel %vm1345, %v1363, 0.0
        %1371 = vadd.xlane.f32.xlu0 %v1370
        %v1372 = vpop.xlane.xlu0 %1371
        %v1373 = vsel %vm1345, %v1365, 0.0
        %1374 = vadd.xlane.f32.xlu0 %v1373
        %v1375 = vpop.xlane.xlu0 %1374
        %v1376 = vsel %vm1345, %v1367, 0.0
        %1377 = vadd.xlane.f32.xlu0 %v1376
        %v1378 = vpop.xlane.xlu0 %1377
        %v1379 = vsel %vm1345, %v1369, 0.0
        %1380 = vadd.xlane.f32.xlu0 %v1379
        %v1381 = vpop.xlane.xlu0 %1380
        %v1382 = vrcp.pop %v1372
        %v1383 = vrcp.pop %v1375
        %v1384 = vrcp.pop %v1378
        %v1385 = vrcp.pop %v1381
        %v1386 = vmul.f32 %v1363, %v1382
        %v1387 = vmul.f32 %v1365, %v1383
        %v1388 = vmul.f32 %v1367, %v1384
        %v1389 = vmul.f32 %v1369, %v1385
        %v1390 = vpack.c.bf16 %v1386, %v1386
        %v1391 = vpack.c.bf16 %v1387, %v1387
        %v1392 = vpack.c.bf16 %v1388, %v1388
        %v1393 = vpack.c.bf16 %v1389, %v1389
        %v1395 = vsel %vm1345, %v1164, 0
        %v1398 = vsel %vm1345, %v1165, 0
        %v1401 = vsel %vm1345, %v1390, 0
        %1403 = vmatprep.subr.bf16.mxu0 0
        %1404 = vmatpush1.bf16.xpose.msra.mxu0 %v1401
        %1405 = vmatprep.subr.bf16.mxu0 0
        %1406 = vmatpush1.bf16.xpose.msra.mxu0 0
        %1407 = vmatprep.subr.bf16.mxu0 0
        %1408 = vmatpush1.bf16.xpose.msra.mxu0 0
        %1409 = vmatprep.subr.bf16.mxu0 0
        %1410 = vmatpush1.bf16.xpose.msra.mxu0 0
        %1411 = vmatprep.subr.bf16.mxu0 0
        %1412 = vmatpush1.bf16.xpose.msra.mxu0 0
        %1413 = vmatprep.subr.bf16.mxu0 0
        %1414 = vmatpush1.bf16.xpose.msra.mxu0 0
        %1415 = vmatprep.subr.bf16.mxu0 0
        %1416 = vmatpush1.bf16.xpose.msra.mxu0 0
        %1417 = vmatprep.subr.bf16.mxu0 0
        %1418 = vmatpush1.bf16.xpose.msra.mxu0 0
        %1419 = vmatprep.subr.bf16.mxu0 0
        %1420 = vmatpush1.bf16.xpose.msra.mxu0 0
        %1421 = vmatprep.subr.bf16.mxu0 0
        %1422 = vmatpush1.bf16.xpose.msra.mxu0 0
        %1423 = vmatprep.subr.bf16.mxu0 0
        %1424 = vmatpush1.bf16.xpose.msra.mxu0 0
        %1425 = vmatprep.subr.bf16.mxu0 0
        %1426 = vmatpush1.bf16.xpose.msra.mxu0 0
        %1427 = vmatprep.subr.bf16.mxu0 0
        %1428 = vmatpush1.bf16.xpose.msra.mxu0 0
        %1429 = vmatprep.subr.bf16.mxu0 0
        %1430 = vmatpush1.bf16.xpose.msra.mxu0 0
        %1431 = vmatprep.subr.bf16.mxu0 0
        %1432 = vmatpush1.bf16.xpose.msra.mxu0 0
        %1433 = vmatprep.subr.bf16.mxu0 0
        %1434 = vmatpush1.bf16.xpose.msra.mxu0 0
        %1435 = vmatprep.mubr.bf16.mxu0 0
        %1436 = vmatmul.mubr.bf16.gmra.mrb[0].mxu0 %v1395
        %v1437 = vpop.f32.mrb[0].mxu0
        %v1438 = vadd.f32 0.0, %v1437
        %v1439 = vpop.f32.mrb[0].mxu0
        %v1440 = vpop.f32.mrb[0].mxu0
        %v1441 = vadd.f32 0.0, %v1440
        %v1442 = vpop.f32.mrb[0].mxu0
        %1443 = vmatprep.mubr.bf16.mxu0 0
        %1444 = vmatmul.mubr.bf16.gmra.mrb[0].mxu0 %v1398
        %v1445 = vpop.f32.mrb[0].mxu0
        %v1446 = vadd.f32 0.0, %v1445
        %v1447 = vpop.f32.mrb[0].mxu0
        %v1448 = vpop.f32.mrb[0].mxu0
        %v1449 = vadd.f32 0.0, %v1448
        %v1450 = vpop.f32.mrb[0].mxu0
        %1451 = vdwg.mxu0
        %v1453 = vsel %vm1345, %v1166, 0
        %v1456 = vsel %vm1345, %v1167, 0
        %v1459 = vsel %vm1345, %v1391, 0
        %1461 = vmatprep.subr.bf16.mxu0 0
        %1462 = vmatpush1.bf16.xpose.msra.mxu0 %v1459
        %1463 = vmatprep.subr.bf16.mxu0 0
        %1464 = vmatpush1.bf16.xpose.msra.mxu0 0
        %1465 = vmatprep.subr.bf16.mxu0 0
        %1466 = vmatpush1.bf16.xpose.msra.mxu0 0
        %1467 = vmatprep.subr.bf16.mxu0 0
        %1468 = vmatpush1.bf16.xpose.msra.mxu0 0
        %1469 = vmatprep.subr.bf16.mxu0 0
        %1470 = vmatpush1.bf16.xpose.msra.mxu0 0
        %1471 = vmatprep.subr.bf16.mxu0 0
        %1472 = vmatpush1.bf16.xpose.msra.mxu0 0
        %1473 = vmatprep.subr.bf16.mxu0 0
        %1474 = vmatpush1.bf16.xpose.msra.mxu0 0
        %1475 = vmatprep.subr.bf16.mxu0 0
        %1476 = vmatpush1.bf16.xpose.msra.mxu0 0
        %1477 = vmatprep.subr.bf16.mxu0 0
        %1478 = vmatpush1.bf16.xpose.msra.mxu0 0
        %1479 = vmatprep.subr.bf16.mxu0 0
        %1480 = vmatpush1.bf16.xpose.msra.mxu0 0
        %1481 = vmatprep.subr.bf16.mxu0 0
        %1482 = vmatpush1.bf16.xpose.msra.mxu0 0
        %1483 = vmatprep.subr.bf16.mxu0 0
        %1484 = vmatpush1.bf16.xpose.msra.mxu0 0
        %1485 = vmatprep.subr.bf16.mxu0 0
        %1486 = vmatpush1.bf16.xpose.msra.mxu0 0
        %1487 = vmatprep.subr.bf16.mxu0 0
        %1488 = vmatpush1.bf16.xpose.msra.mxu0 0
        %1489 = vmatprep.subr.bf16.mxu0 0
        %1490 = vmatpush1.bf16.xpose.msra.mxu0 0
        %1491 = vmatprep.subr.bf16.mxu0 0
        %1492 = vmatpush1.bf16.xpose.msra.mxu0 0
        %1493 = vmatprep.mubr.bf16.mxu0 0
        %1494 = vmatmul.mubr.bf16.gmra.mrb[0].mxu0 %v1453
        %v1495 = vpop.f32.mrb[0].mxu0
        %v1496 = vadd.f32 0.0, %v1495
        %v1497 = vpop.f32.mrb[0].mxu0
        %v1498 = vpop.f32.mrb[0].mxu0
        %v1499 = vadd.f32 0.0, %v1498
        %v1500 = vpop.f32.mrb[0].mxu0
        %1501 = vmatprep.mubr.bf16.mxu0 0
        %1502 = vmatmul.mubr.bf16.gmra.mrb[0].mxu0 %v1456
        %v1503 = vpop.f32.mrb[0].mxu0
        %v1504 = vadd.f32 0.0, %v1503
        %v1505 = vpop.f32.mrb[0].mxu0
        %v1506 = vpop.f32.mrb[0].mxu0
        %v1507 = vadd.f32 0.0, %v1506
        %v1508 = vpop.f32.mrb[0].mxu0
        %1509 = vdwg.mxu0
        %v1511 = vsel %vm1345, %v1168, 0
        %v1514 = vsel %vm1345, %v1169, 0
        %v1517 = vsel %vm1345, %v1392, 0
        %1519 = vmatprep.subr.bf16.mxu0 0
        %1520 = vmatpush1.bf16.xpose.msra.mxu0 %v1517
        %1521 = vmatprep.subr.bf16.mxu0 0
        %1522 = vmatpush1.bf16.xpose.msra.mxu0 0
        %1523 = vmatprep.subr.bf16.mxu0 0
        %1524 = vmatpush1.bf16.xpose.msra.mxu0 0
        %1525 = vmatprep.subr.bf16.mxu0 0
        %1526 = vmatpush1.bf16.xpose.msra.mxu0 0
        %1527 = vmatprep.subr.bf16.mxu0 0
        %1528 = vmatpush1.bf16.xpose.msra.mxu0 0
        %1529 = vmatprep.subr.bf16.mxu0 0
        %1530 = vmatpush1.bf16.xpose.msra.mxu0 0
        %1531 = vmatprep.subr.bf16.mxu0 0
        %1532 = vmatpush1.bf16.xpose.msra.mxu0 0
        %1533 = vmatprep.subr.bf16.mxu0 0
        %1534 = vmatpush1.bf16.xpose.msra.mxu0 0
        %1535 = vmatprep.subr.bf16.mxu0 0
        %1536 = vmatpush1.bf16.xpose.msra.mxu0 0
        %1537 = vmatprep.subr.bf16.mxu0 0
        %1538 = vmatpush1.bf16.xpose.msra.mxu0 0
        %1539 = vmatprep.subr.bf16.mxu0 0
        %1540 = vmatpush1.bf16.xpose.msra.mxu0 0
        %1541 = vmatprep.subr.bf16.mxu0 0
        %1542 = vmatpush1.bf16.xpose.msra.mxu0 0
        %1543 = vmatprep.subr.bf16.mxu0 0
        %1544 = vmatpush1.bf16.xpose.msra.mxu0 0
        %1545 = vmatprep.subr.bf16.mxu0 0
        %1546 = vmatpush1.bf16.xpose.msra.mxu0 0
        %1547 = vmatprep.subr.bf16.mxu0 0
        %1548 = vmatpush1.bf16.xpose.msra.mxu0 0
        %1549 = vmatprep.subr.bf16.mxu0 0
        %1550 = vmatpush1.bf16.xpose.msra.mxu0 0
        %1551 = vmatprep.mubr.bf16.mxu0 0
        %1552 = vmatmul.mubr.bf16.gmra.mrb[0].mxu0 %v1511
        %v1553 = vpop.f32.mrb[0].mxu0
        %v1554 = vadd.f32 0.0, %v1553
        %v1555 = vpop.f32.mrb[0].mxu0
        %v1556 = vpop.f32.mrb[0].mxu0
        %v1557 = vadd.f32 0.0, %v1556
        %v1558 = vpop.f32.mrb[0].mxu0
        %1559 = vmatprep.mubr.bf16.mxu0 0
        %1560 = vmatmul.mubr.bf16.gmra.mrb[0].mxu0 %v1514
        %v1561 = vpop.f32.mrb[0].mxu0
        %v1562 = vadd.f32 0.0, %v1561
        %v1563 = vpop.f32.mrb[0].mxu0
        %v1564 = vpop.f32.mrb[0].mxu0
        %v1565 = vadd.f32 0.0, %v1564
        %v1566 = vpop.f32.mrb[0].mxu0
        %1567 = vdwg.mxu0
        %v1569 = vsel %vm1345, %v1170, 0
        %v1572 = vsel %vm1345, %v1171, 0
        %v1575 = vsel %vm1345, %v1393, 0
        %1577 = vmatprep.subr.bf16.mxu0 0
        %1578 = vmatpush1.bf16.xpose.msra.mxu0 %v1575
        %1579 = vmatprep.subr.bf16.mxu0 0
        %1580 = vmatpush1.bf16.xpose.msra.mxu0 0
        %1581 = vmatprep.subr.bf16.mxu0 0
        %1582 = vmatpush1.bf16.xpose.msra.mxu0 0
        %1583 = vmatprep.subr.bf16.mxu0 0
        %1584 = vmatpush1.bf16.xpose.msra.mxu0 0
        %1585 = vmatprep.subr.bf16.mxu0 0
        %1586 = vmatpush1.bf16.xpose.msra.mxu0 0
        %1587 = vmatprep.subr.bf16.mxu0 0
        %1588 = vmatpush1.bf16.xpose.msra.mxu0 0
        %1589 = vmatprep.subr.bf16.mxu0 0
        %1590 = vmatpush1.bf16.xpose.msra.mxu0 0
        %1591 = vmatprep.subr.bf16.mxu0 0
        %1592 = vmatpush1.bf16.xpose.msra.mxu0 0
        %1593 = vmatprep.subr.bf16.mxu0 0
        %1594 = vmatpush1.bf16.xpose.msra.mxu0 0
        %1595 = vmatprep.subr.bf16.mxu0 0
        %1596 = vmatpush1.bf16.xpose.msra.mxu0 0
        %1597 = vmatprep.subr.bf16.mxu0 0
        %1598 = vmatpush1.bf16.xpose.msra.mxu0 0
        %1599 = vmatprep.subr.bf16.mxu0 0
        %1600 = vmatpush1.bf16.xpose.msra.mxu0 0
        %1601 = vmatprep.subr.bf16.mxu0 0
        %1602 = vmatpush1.bf16.xpose.msra.mxu0 0
        %1603 = vmatprep.subr.bf16.mxu0 0
        %1604 = vmatpush1.bf16.xpose.msra.mxu0 0
        %1605 = vmatprep.subr.bf16.mxu0 0
        %1606 = vmatpush1.bf16.xpose.msra.mxu0 0
        %1607 = vmatprep.subr.bf16.mxu0 0
        %1608 = vmatpush1.bf16.xpose.msra.mxu0 0
        %1609 = vmatprep.mubr.bf16.mxu0 0
        %1610 = vmatmul.mubr.bf16.gmra.mrb[0].mxu0 %v1569
        %v1611 = vpop.f32.mrb[0].mxu0
        %v1612 = vadd.f32 0.0, %v1611
        %v1613 = vpop.f32.mrb[0].mxu0
        %v1614 = vpop.f32.mrb[0].mxu0
        %v1615 = vadd.f32 0.0, %v1614
        %v1616 = vpop.f32.mrb[0].mxu0
        %1617 = vmatprep.mubr.bf16.mxu0 0
        %1618 = vmatmul.mubr.bf16.gmra.mrb[0].mxu0 %v1572
        %v1619 = vpop.f32.mrb[0].mxu0
        %v1620 = vadd.f32 0.0, %v1619
        %v1621 = vpop.f32.mrb[0].mxu0
        %v1622 = vpop.f32.mrb[0].mxu0
        %v1623 = vadd.f32 0.0, %v1622
        %v1624 = vpop.f32.mrb[0].mxu0
        %1625 = vdwg.mxu0
        %1626 = vxpose.xlu0.b32.start [1/16] %v1438, 128
        %1627 = vxpose.xlu0.b32.cont [2/16] %v1441, 128
        %1628 = vxpose.xlu0.b32.cont [3/16] %v1446, 128
        %1629 = vxpose.xlu0.b32.cont [4/16] %v1449, 128
        %1630 = vxpose.xlu0.b32.cont [5/16] %v1496, 128
        %1631 = vxpose.xlu0.b32.cont [6/16] %v1499, 128
        %1632 = vxpose.xlu0.b32.cont [7/16] %v1504, 128
        %1633 = vxpose.xlu0.b32.cont [8/16] %v1507, 128
        %1634 = vxpose.xlu0.b32.cont [9/16] %v1554, 128
        %1635 = vxpose.xlu0.b32.cont [10/16] %v1557, 128
        %1636 = vxpose.xlu0.b32.cont [11/16] %v1562, 128
        %1637 = vxpose.xlu0.b32.cont [12/16] %v1565, 128
        %1638 = vxpose.xlu0.b32.cont [13/16] %v1612, 128
        %1639 = vxpose.xlu0.b32.cont [14/16] %v1615, 128
        %1640 = vxpose.xlu0.b32.cont [15/16] %v1620, 128
        %1641 = vxpose.xlu0.b32.end [16/16] %v1623, 128
        %v1642 = vpop.trf.xlu0
        %v1643 = vpop.trf.xlu0
        %v1644 = vpop.trf.xlu0
        %v1645 = vpop.trf.xlu0
        %v1646 = vpop.trf.xlu0
        %v1647 = vpop.trf.xlu0
        %v1648 = vpop.trf.xlu0
        %v1649 = vpop.trf.xlu0
        %v1650 = vpop.trf.xlu0
        %v1651 = vpop.trf.xlu0
        %v1652 = vpop.trf.xlu0
        %v1653 = vpop.trf.xlu0
        %v1654 = vpop.trf.xlu0
        %v1655 = vpop.trf.xlu0
        %v1656 = vpop.trf.xlu0
        %v1657 = vpop.trf.xlu0
        %v1658 = vpack.c.bf16 %v1642, %v1642
        %v1659 = vld [vmem:[#allocation10] sm:$0xf]
        %v1660 = vld [vmem:[#allocation10 + $0x4] sm:$0xf]
        %v1661 = vld [vmem:[#allocation10 + $0x8] sm:$0xf]
        %v1662 = vld [vmem:[#allocation10 + $0xc] sm:$0xf]
        %v1663 = vld [vmem:[#allocation10 + $0x10] sm:$0xf]
        %v1664 = vld [vmem:[#allocation10 + $0x14] sm:$0xf]
        %v1665 = vld [vmem:[#allocation10 + $0x18] sm:$0xf]
        %v1666 = vld [vmem:[#allocation10 + $0x1c] sm:$0xf]
        %v1667 = vld [vmem:[#allocation10 + $0x20] sm:$0xf]
        %v1668 = vld [vmem:[#allocation10 + $0x24] sm:$0xf]
        %v1669 = vld [vmem:[#allocation10 + $0x28] sm:$0xf]
        %v1670 = vld [vmem:[#allocation10 + $0x2c] sm:$0xf]
        %v1671 = vld [vmem:[#allocation10 + $0x30] sm:$0xf]
        %v1672 = vld [vmem:[#allocation10 + $0x34] sm:$0xf]
        %v1673 = vld [vmem:[#allocation10 + $0x38] sm:$0xf]
        %v1674 = vld [vmem:[#allocation10 + $0x3c] sm:$0xf]
        %v1675 = vld [vmem:[%s7] sm:$0x1]
        %v1677 = vlaneseq
        %v1678 = vshrl.u32 %v1677, 7
        %v1679 = vsub.s32 0, %v1678
        %v1680 = vrot.slane %v1675, %v1679
        %v1698 = vunpack.c.l.b16 %v1659
        %v1699 = vunpack.c.l.b16 %v1660
        %v1700 = vunpack.c.l.b16 %v1661
        %v1701 = vunpack.c.l.b16 %v1662
        %v1702 = vunpack.c.l.b16 %v1663
        %v1703 = vunpack.c.l.b16 %v1664
        %v1704 = vunpack.c.l.b16 %v1665
        %v1705 = vunpack.c.l.b16 %v1666
        %v1706 = vunpack.c.l.b16 %v1667
        %v1707 = vunpack.c.l.b16 %v1668
        %v1708 = vunpack.c.l.b16 %v1669
        %v1709 = vunpack.c.l.b16 %v1670
        %v1710 = vunpack.c.l.b16 %v1671
        %v1711 = vunpack.c.l.b16 %v1672
        %v1712 = vunpack.c.l.b16 %v1673
        %v1713 = vunpack.c.l.b16 %v1674
        %v1714 = vpack.c.b16 %v1699, %v1698
        %v1715 = vpack.c.b16 %v1701, %v1700
        %v1716 = vpack.c.b16 %v1703, %v1702
        %v1717 = vpack.c.b16 %v1705, %v1704
        %v1718 = vpack.c.b16 %v1707, %v1706
        %v1719 = vpack.c.b16 %v1709, %v1708
        %v1720 = vpack.c.b16 %v1711, %v1710
        %v1721 = vpack.c.b16 %v1713, %v1712
        %1730 = vmatprep.subr.bf16.mxu0 0
        %1731 = vmatpush1.bf16.msra.mxu0 %v1714
        %1732 = vmatprep.subr.bf16.mxu0 0
        %1733 = vmatpush1.bf16.msra.mxu0 %v1715
        %1734 = vmatprep.subr.bf16.mxu0 0
        %1735 = vmatpush1.bf16.msra.mxu0 %v1716
        %1736 = vmatprep.subr.bf16.mxu0 0
        %1737 = vmatpush1.bf16.msra.mxu0 %v1717
        %1738 = vmatprep.subr.bf16.mxu0 0
        %1739 = vmatpush1.bf16.msra.mxu0 %v1718
        %1740 = vmatprep.subr.bf16.mxu0 0
        %1741 = vmatpush1.bf16.msra.mxu0 %v1719
        %1742 = vmatprep.subr.bf16.mxu0 0
        %1743 = vmatpush1.bf16.msra.mxu0 %v1720
        %1744 = vmatprep.subr.bf16.mxu0 0
        %1745 = vmatpush1.bf16.msra.mxu0 %v1721
        %1746 = vmatprep.subr.bf16.mxu0 0
        %1747 = vmatpush1.bf16.msra.mxu0 0
        %1748 = vmatprep.subr.bf16.mxu0 0
        %1749 = vmatpush1.bf16.msra.mxu0 0
        %1750 = vmatprep.subr.bf16.mxu0 0
        %1751 = vmatpush1.bf16.msra.mxu0 0
        %1752 = vmatprep.subr.bf16.mxu0 0
        %1753 = vmatpush1.bf16.msra.mxu0 0
        %1754 = vmatprep.subr.bf16.mxu0 0
        %1755 = vmatpush1.bf16.msra.mxu0 0
        %1756 = vmatprep.subr.bf16.mxu0 0
        %1757 = vmatpush1.bf16.msra.mxu0 0
        %1758 = vmatprep.subr.bf16.mxu0 0
        %1759 = vmatpush1.bf16.msra.mxu0 0
        %1760 = vmatprep.subr.bf16.mxu0 0
        %1761 = vmatpush1.bf16.msra.mxu0 0
        %1762 = vmatprep.mubr.bf16.mxu0 0
        %1763 = vmatmul.mubr.bf16.gmra.mrb[0].mxu0 %v1658
        %v1764 = vpop.f32.mrb[0].mxu0
        %v1765 = vadd.f32 %v1680, %v1764
        %v1766 = vpop.f32.mrb[0].mxu0
        %v1767 = vpop.f32.mrb[0].mxu0
        %v1768 = vpop.f32.mrb[0].mxu0
        %1769 = vdwg.mxu0
        %v1770 = vadd.f32 %v1765, %v664
        %1771 = vadd.xlane.f32.xlu0 %v1770
        %v1772 = vpop.xlane.xlu0 %1771
        %v1773 = vmul.f32 %v1772, 0.03125
        %v1774 = vmul.f32 %v1770, %v1770
        %1775 = vadd.xlane.f32.xlu0 %v1774
        %v1776 = vpop.xlane.xlu0 %1775
        %v1777 = vmul.f32 %v1776, 0.03125
        %v1778 = vmul.f32 %v1773, %v1773
        %v1779 = vsub.f32 %v1777, %v1778
        %v1780 = vsub.f32 %v1770, %v1773
        %v1781 = vadd.f32 %v1779, 1e-05
        %v1782 = vrsqrt.pop %v1781
        %v1783 = vmul.f32 %v1780, %v1782
        %v1784 = vld [vmem:[%s8] sm:$0x1]
        %v1786 = vlaneseq
        %v1787 = vshrl.u32 %v1786, 7
        %v1788 = vsub.s32 0, %v1787
        %v1789 = vrot.slane %v1784, %v1788
        %v1791 = vmul.f32 %v1783, %v1789
        %v1792 = vld [vmem:[%s9] sm:$0x1]
        %v1794 = vlaneseq
        %v1795 = vshrl.u32 %v1794, 7
        %v1796 = vsub.s32 0, %v1795
        %v1797 = vrot.slane %v1792, %v1796
        %v1799 = vadd.f32 %v1791, %v1797
        %v1800 = vpack.c.bf16 %v1799, %v1799
        %v1801 = vld [vmem:[#allocation11] sm:$0xf]
        %v1802 = vld [vmem:[#allocation11 + $0x4] sm:$0xf]
        %v1803 = vld [vmem:[#allocation11 + $0x8] sm:$0xf]
        %v1804 = vld [vmem:[#allocation11 + $0xc] sm:$0xf]
        %v1805 = vld [vmem:[#allocation11 + $0x10] sm:$0xf]
        %v1806 = vld [vmem:[#allocation11 + $0x14] sm:$0xf]
        %v1807 = vld [vmem:[#allocation11 + $0x18] sm:$0xf]
        %v1808 = vld [vmem:[#allocation11 + $0x1c] sm:$0xf]
        %v1809 = vld [vmem:[#allocation11 + $0x20] sm:$0xf]
        %v1810 = vld [vmem:[#allocation11 + $0x24] sm:$0xf]
        %v1811 = vld [vmem:[#allocation11 + $0x28] sm:$0xf]
        %v1812 = vld [vmem:[#allocation11 + $0x2c] sm:$0xf]
        %v1813 = vld [vmem:[#allocation11 + $0x30] sm:$0xf]
        %v1814 = vld [vmem:[#allocation11 + $0x34] sm:$0xf]
        %v1815 = vld [vmem:[#allocation11 + $0x38] sm:$0xf]
        %v1816 = vld [vmem:[#allocation11 + $0x3c] sm:$0xf]
        %v1817 = vld [vmem:[%s11] sm:$0x1]
        %v1819 = vlaneseq
        %v1820 = vshrl.u32 %v1819, 7
        %v1821 = vsub.s32 0, %v1820
        %v1822 = vrot.slane %v1817, %v1821
        %v1840 = vunpack.c.l.b16 %v1801
        %v1841 = vunpack.c.l.b16 %v1802
        %v1842 = vunpack.c.l.b16 %v1803
        %v1843 = vunpack.c.l.b16 %v1804
        %v1844 = vunpack.c.l.b16 %v1805
        %v1845 = vunpack.c.l.b16 %v1806
        %v1846 = vunpack.c.l.b16 %v1807
        %v1847 = vunpack.c.l.b16 %v1808
        %v1848 = vunpack.c.l.b16 %v1809
        %v1849 = vunpack.c.l.b16 %v1810
        %v1850 = vunpack.c.l.b16 %v1811
        %v1851 = vunpack.c.l.b16 %v1812
        %v1852 = vunpack.c.l.b16 %v1813
        %v1853 = vunpack.c.l.b16 %v1814
        %v1854 = vunpack.c.l.b16 %v1815
        %v1855 = vunpack.c.l.b16 %v1816
        %v1856 = vpack.c.b16 %v1841, %v1840
        %v1857 = vpack.c.b16 %v1843, %v1842
        %v1858 = vpack.c.b16 %v1845, %v1844
        %v1859 = vpack.c.b16 %v1847, %v1846
        %v1860 = vpack.c.b16 %v1849, %v1848
        %v1861 = vpack.c.b16 %v1851, %v1850
        %v1862 = vpack.c.b16 %v1853, %v1852
        %v1863 = vpack.c.b16 %v1855, %v1854
        %1872 = vmatprep.subr.bf16.mxu0 0
        %1873 = vmatpush1.bf16.msra.mxu0 %v1856
        %1874 = vmatprep.subr.bf16.mxu0 0
        %1875 = vmatpush1.bf16.msra.mxu0 %v1857
        %1876 = vmatprep.subr.bf16.mxu0 0
        %1877 = vmatpush1.bf16.msra.mxu0 %v1858
        %1878 = vmatprep.subr.bf16.mxu0 0
        %1879 = vmatpush1.bf16.msra.mxu0 %v1859
        %1880 = vmatprep.subr.bf16.mxu0 0
        %1881 = vmatpush1.bf16.msra.mxu0 %v1860
        %1882 = vmatprep.subr.bf16.mxu0 0
        %1883 = vmatpush1.bf16.msra.mxu0 %v1861
        %1884 = vmatprep.subr.bf16.mxu0 0
        %1885 = vmatpush1.bf16.msra.mxu0 %v1862
        %1886 = vmatprep.subr.bf16.mxu0 0
        %1887 = vmatpush1.bf16.msra.mxu0 %v1863
        %1888 = vmatprep.subr.bf16.mxu0 0
        %1889 = vmatpush1.bf16.msra.mxu0 0
        %1890 = vmatprep.subr.bf16.mxu0 0
        %1891 = vmatpush1.bf16.msra.mxu0 0
        %1892 = vmatprep.subr.bf16.mxu0 0
        %1893 = vmatpush1.bf16.msra.mxu0 0
        %1894 = vmatprep.subr.bf16.mxu0 0
        %1895 = vmatpush1.bf16.msra.mxu0 0
        %1896 = vmatprep.subr.bf16.mxu0 0
        %1897 = vmatpush1.bf16.msra.mxu0 0
        %1898 = vmatprep.subr.bf16.mxu0 0
        %1899 = vmatpush1.bf16.msra.mxu0 0
        %1900 = vmatprep.subr.bf16.mxu0 0
        %1901 = vmatpush1.bf16.msra.mxu0 0
        %1902 = vmatprep.subr.bf16.mxu0 0
        %1903 = vmatpush1.bf16.msra.mxu0 0
        %1904 = vmatprep.mubr.bf16.mxu0 0
        %1905 = vmatmul.mubr.bf16.gmra.mrb[0].mxu0 %v1800
        %v1906 = vpop.f32.mrb[0].mxu0
        %v1907 = vadd.f32 %v1822, %v1906
        %v1908 = vpop.f32.mrb[0].mxu0
        %v1909 = vpop.f32.mrb[0].mxu0
        %v1910 = vpop.f32.mrb[0].mxu0
        %1911 = vdwg.mxu0
        %v1912 = vmax.f32 %v1907, 0.0
        %v1913 = vpack.c.bf16 %v1912, %v1912
        %v1914 = vld [vmem:[#allocation13] sm:$0xf]
        %v1915 = vld [vmem:[#allocation13 + $0x4] sm:$0xf]
        %v1916 = vld [vmem:[#allocation13 + $0x8] sm:$0xf]
        %v1917 = vld [vmem:[#allocation13 + $0xc] sm:$0xf]
        %v1918 = vld [vmem:[#allocation13 + $0x10] sm:$0xf]
        %v1919 = vld [vmem:[#allocation13 + $0x14] sm:$0xf]
        %v1920 = vld [vmem:[#allocation13 + $0x18] sm:$0xf]
        %v1921 = vld [vmem:[#allocation13 + $0x1c] sm:$0xf]
        %v1922 = vld [vmem:[#allocation13 + $0x20] sm:$0xf]
        %v1923 = vld [vmem:[#allocation13 + $0x24] sm:$0xf]
        %v1924 = vld [vmem:[#allocation13 + $0x28] sm:$0xf]
        %v1925 = vld [vmem:[#allocation13 + $0x2c] sm:$0xf]
        %v1926 = vld [vmem:[#allocation13 + $0x30] sm:$0xf]
        %v1927 = vld [vmem:[#allocation13 + $0x34] sm:$0xf]
        %v1928 = vld [vmem:[#allocation13 + $0x38] sm:$0xf]
        %v1929 = vld [vmem:[#allocation13 + $0x3c] sm:$0xf]
        %v1930 = vld [vmem:[%s13] sm:$0x1]
        %v1932 = vlaneseq
        %v1933 = vshrl.u32 %v1932, 7
        %v1934 = vsub.s32 0, %v1933
        %v1935 = vrot.slane %v1930, %v1934
        %v1953 = vunpack.c.l.b16 %v1914
        %v1954 = vunpack.c.l.b16 %v1915
        %v1955 = vunpack.c.l.b16 %v1916
        %v1956 = vunpack.c.l.b16 %v1917
        %v1957 = vunpack.c.l.b16 %v1918
        %v1958 = vunpack.c.l.b16 %v1919
        %v1959 = vunpack.c.l.b16 %v1920
        %v1960 = vunpack.c.l.b16 %v1921
        %v1961 = vunpack.c.l.b16 %v1922
        %v1962 = vunpack.c.l.b16 %v1923
        %v1963 = vunpack.c.l.b16 %v1924
        %v1964 = vunpack.c.l.b16 %v1925
        %v1965 = vunpack.c.l.b16 %v1926
        %v1966 = vunpack.c.l.b16 %v1927
        %v1967 = vunpack.c.l.b16 %v1928
        %v1968 = vunpack.c.l.b16 %v1929
        %v1969 = vpack.c.b16 %v1954, %v1953
        %v1970 = vpack.c.b16 %v1956, %v1955
        %v1971 = vpack.c.b16 %v1958, %v1957
        %v1972 = vpack.c.b16 %v1960, %v1959
        %v1973 = vpack.c.b16 %v1962, %v1961
        %v1974 = vpack.c.b16 %v1964, %v1963
        %v1975 = vpack.c.b16 %v1966, %v1965
        %v1976 = vpack.c.b16 %v1968, %v1967
        %1985 = vmatprep.subr.bf16.mxu0 0
        %1986 = vmatpush1.bf16.msra.mxu0 %v1969
        %1987 = vmatprep.subr.bf16.mxu0 0
        %1988 = vmatpush1.bf16.msra.mxu0 %v1970
        %1989 = vmatprep.subr.bf16.mxu0 0
        %1990 = vmatpush1.bf16.msra.mxu0 %v1971
        %1991 = vmatprep.subr.bf16.mxu0 0
        %1992 = vmatpush1.bf16.msra.mxu0 %v1972
        %1993 = vmatprep.subr.bf16.mxu0 0
        %1994 = vmatpush1.bf16.msra.mxu0 %v1973
        %1995 = vmatprep.subr.bf16.mxu0 0
        %1996 = vmatpush1.bf16.msra.mxu0 %v1974
        %1997 = vmatprep.subr.bf16.mxu0 0
        %1998 = vmatpush1.bf16.msra.mxu0 %v1975
        %1999 = vmatprep.subr.bf16.mxu0 0
        %2000 = vmatpush1.bf16.msra.mxu0 %v1976
        %2001 = vmatprep.subr.bf16.mxu0 0
        %2002 = vmatpush1.bf16.msra.mxu0 0
        %2003 = vmatprep.subr.bf16.mxu0 0
        %2004 = vmatpush1.bf16.msra.mxu0 0
        %2005 = vmatprep.subr.bf16.mxu0 0
        %2006 = vmatpush1.bf16.msra.mxu0 0
        %2007 = vmatprep.subr.bf16.mxu0 0
        %2008 = vmatpush1.bf16.msra.mxu0 0
        %2009 = vmatprep.subr.bf16.mxu0 0
        %2010 = vmatpush1.bf16.msra.mxu0 0
        %2011 = vmatprep.subr.bf16.mxu0 0
        %2012 = vmatpush1.bf16.msra.mxu0 0
        %2013 = vmatprep.subr.bf16.mxu0 0
        %2014 = vmatpush1.bf16.msra.mxu0 0
        %2015 = vmatprep.subr.bf16.mxu0 0
        %2016 = vmatpush1.bf16.msra.mxu0 0
        %2017 = vmatprep.mubr.bf16.mxu0 0
        %2018 = vmatmul.mubr.bf16.gmra.mrb[0].mxu0 %v1913
        %v2019 = vpop.f32.mrb[0].mxu0
        %v2020 = vadd.f32 %v1935, %v2019
        %v2021 = vpop.f32.mrb[0].mxu0
        %v2022 = vpop.f32.mrb[0].mxu0
        %v2023 = vpop.f32.mrb[0].mxu0
        %2024 = vdwg.mxu0
        %v2025 = vadd.f32 %v2020, %v1799
        %2026 = vadd.xlane.f32.xlu0 %v2025
        %v2027 = vpop.xlane.xlu0 %2026
        %v2028 = vmul.f32 %v2027, 0.03125
        %v2029 = vmul.f32 %v2025, %v2025
        %2030 = vadd.xlane.f32.xlu0 %v2029
        %v2031 = vpop.xlane.xlu0 %2030
        %v2032 = vmul.f32 %v2031, 0.03125
        %v2033 = vmul.f32 %v2028, %v2028
        %v2034 = vsub.f32 %v2032, %v2033
        %v2035 = vsub.f32 %v2025, %v2028
        %v2036 = vadd.f32 %v2034, 1e-05
        %v2037 = vrsqrt.pop %v2036
        %v2038 = vmul.f32 %v2035, %v2037
        %v2039 = vld [vmem:[%s14] sm:$0x1]
        %v2041 = vlaneseq
        %v2042 = vshrl.u32 %v2041, 7
        %v2043 = vsub.s32 0, %v2042
        %v2044 = vrot.slane %v2039, %v2043
        %v2046 = vmul.f32 %v2038, %v2044
        %v2047 = vld [vmem:[%s15] sm:$0x1]
        %v2049 = vlaneseq
        %v2050 = vshrl.u32 %v2049, 7
        %v2051 = vsub.s32 0, %v2050
        %v2052 = vrot.slane %v2047, %v2051
        %v2054 = vadd.f32 %v2046, %v2052
        %2055 = vst [vmem:[%s662] sm:$0xff] %v2054
        %s2056 = sand.u32 %s408, 1
        %s2057 = scalar_lea.sflag [#allocation4], %s2056
        %s2058 = sand.u32 %s408, 1
        %s2059 = smul.addr %s2058, 8
        %s2060 = scalar_lea.vmem [#allocation14], %s2059
        // Predicated region
        $region113: #{tpu_custom_call.1} parent=83 // pred_check
          %p2061 = pneg %p418
        $region114: #{tpu_custom_call.1} parent=83 // pred_check_branch
          %2063 = sbr.rel (%p2061) target = $region116
        $region115: #{tpu_custom_call.1} parent=83 // pred_region
          %s2065 = ssub.s32 128, 128
          %2066 = vsyncadd %s2057, %s2065
          %s2067 = sadd.s32 %s43, %s42
          %s2068 = smul.addr %s2067, 128
          %s2069 = scalar_lea.hbm %s16, %s2068
          %s2071 = sshll.u32 %s2060, 4
          %s2072 = int_to_ptr.vmem [resolvable:$true] %s2071
          %2074 = dma.vmem_to_hbm [thread:$0]  %s2072, 128, %s2069, %s2057
        $region116: #{tpu_custom_call.1} parent=83 // pred_fallthru
          _
      $region84: #{tpu_custom_call.1} parent=5 // pred_fallthru
        _
      %p2075 = scmp.le.s32.totalorder 2, %s33
      // Predicated region
      $region117: #{tpu_custom_call.1} parent=5 // pred_check
        %p2076 = pneg %p2075
      $region118: #{tpu_custom_call.1} parent=5 // pred_check_branch
        %2078 = sbr.rel (%p2076) target = $region120
      $region119: #{tpu_custom_call.1} parent=5 // pred_region
        %s2079 = ssub.s32 %s33, 2
        // Predicated region
        $region121: #{tpu_custom_call.1} parent=119 // pred_check
          %p2080 = pneg %p424
        $region122: #{tpu_custom_call.1} parent=119 // pred_check_branch
          %2082 = sbr.rel (%p2080) target = $region124
        $region123: #{tpu_custom_call.1} parent=119 // pred_region
          %s2083 = sand.u32 %s409, 1
          %s2084 = scalar_lea.sflag [#allocation4], %s2083
          %s2085 = sand.u32 %s409, 1
          %s2086 = smul.addr %s2085, 8
          %s2087 = scalar_lea.vmem [#allocation14], %s2086
          %2088 = dma.done %s2084, 128
        $region124: #{tpu_custom_call.1} parent=119 // pred_fallthru
          _
      $region120: #{tpu_custom_call.1} parent=5 // pred_fallthru
        _
    $region6: #{tpu_custom_call.1} parent=1 // loop_footer
      %s37 = sadd.s32 1, %s33
    $region7: #{tpu_custom_call.1} parent=1 // loop_footer_branch
      %32 = sbr.rel target = $region3
    $region8: #{tpu_custom_call.1} parent=1 // loop_exit
      _
    %2089 = vsyncpa [#allocation3], 1
    %s2090 = scalar_lea.sflag [#allocation3], 1
    %2091 = vsyncpa %s2090, 1
    %2092 = vsyncpa [#allocation6], 1
    %s2093 = scalar_lea.sflag [#allocation6], 1
    %2094 = vsyncpa %s2093, 1
    %2095 = vsyncpa [#allocation9], 1
    %2096 = vsyncpa [#allocation12], 1
    %2097 = vsyncpa [#allocation4], 1
    %s2098 = scalar_lea.sflag [#allocation4], 1
    %2099 = vsyncpa %s2098, 1

</llo_original>
